<compile_context>
chip_gen: v5e
topology: v5e:2x2
jax: 0.10.0
libtpu: 0.0.40
codegen_flags: <defaults>
</compile_context>

<pallas_src>
import math

import numpy as np
import jax
import jax.numpy as jnp
from jax.experimental import pallas as pl
from jax.experimental.pallas import tpu as pltpu


# ----------------------------------------------------------------------------
# Host-side helpers
# ----------------------------------------------------------------------------
def lowpass_basis(seq_len: int, c_half: int):
    """Factor the rfft->truncate->irfft (norm='ortho') low-pass projection.

    The chain is an orthogonal projection P along the sequence axis, so
    P = U @ U^T with U the (S, r) orthonormal basis of the kept bins.  The
    kernel then does two skinny matmuls instead of a dense (S, S) one.
    """
    eye = np.eye(seq_len, dtype=np.float64)
    freq = np.fft.rfft(eye, axis=0, norm="ortho")
    keep = (np.arange(freq.shape[0]) < c_half)[:, None]
    lp = np.fft.irfft(freq * keep, n=seq_len, axis=0, norm="ortho")  # (S, S)
    u, s, _ = np.linalg.svd(lp)
    r = max(1, int(np.sum(s > 0.5)))                 # eigenvalues are 0 / 1
    r_pad = min(seq_len, ((r + 7) // 8) * 8)         # pad to a multiple of 8
    basis = np.zeros((seq_len, r_pad), dtype=np.float32)
    basis[:, :r] = (u[:, :r] * np.sqrt(s[:r])).astype(np.float32)
    basis_t = np.ascontiguousarray(basis.T)
    return jnp.asarray(basis), jnp.asarray(basis_t)


def _tanh_gelu(x):
    # TODO(synk): exact erf-based GELU replaced by the tanh approximation
    # (erf has no guaranteed Pallas/Mosaic lowering); the reference below
    # uses the same approximation so the check is apples-to-apples.
    return 0.5 * x * (1.0 + jnp.tanh(0.7978845608028654 * (x + 0.044715 * x * x * x)))


def _pick_batch_block(B: int, S: int, max_bt: int = 8) -> int:
    """Largest divisor of B (<= max_bt) whose row block (bt*S) is 8-aligned."""
    for bt in range(min(B, max_bt), 0, -1):
        if B % bt:
            continue
        if bt != B and (bt * S) % 8 != 0:
            continue
        return bt
    return B  # full-batch block is always layout-legal


# ----------------------------------------------------------------------------
# Fused encoder: one pallas_call, grid = (batch_blocks, n_layers)
# ----------------------------------------------------------------------------
def bsarec_encoder_pallas(hidden_states, ext_mask, params, *, n_layers, n_heads,
                          alpha, c, layer_norm_eps,
                          output_all_encoded_layers=False,
                          use_bf16=True, batch_block=None):
    B, S, H = hidden_states.shape
    inter = params["w1"].shape[1]
    d = H // n_heads
    assert n_heads * d == H

    # TODO(synk): the shared (S, S) additive mask assumes a batch-invariant
    # (causal) mask; per-example padding masks would need a (1, S, S)
    # per-batch BlockSpec instead.
    ext_mask = jnp.asarray(ext_mask, jnp.float32)
    assert ext_mask.shape == (S, S)

    Bt = batch_block or _pick_batch_block(B, S)
    assert B % Bt == 0
    nb = B // Bt
    R = Bt * S

    basis, basis_t = lowpass_basis(S, c // 2 + 1)
    r_pad = basis.shape[1]

    # --- parameter prep (host side, one-time) --------------------------------
    wdt = jnp.bfloat16 if use_bf16 else jnp.float32
    scale = 1.0 / math.sqrt(d)                     # folded into Wq / bq
    wqkv = jnp.concatenate(                         # fused QKV projection (H, 3H)
        [params["wq"] * scale, params["wk"], params["wv"]], axis=1).astype(wdt)
    wo = params["wo"].astype(wdt)
    w1 = params["w1"].astype(wdt)
    w2 = params["w2"].astype(wdt)

    bqkv = jnp.concatenate(                         # fused QKV bias (1, 3H) f32
        [params["bq"].reshape(-1) * scale, params["bk"].reshape(-1),
         params["bv"].reshape(-1)], axis=0).reshape(1, 3 * H).astype(jnp.float32)

    vech = jnp.stack(                               # remaining (H,)-vectors, f32
        [params["bo"].reshape(-1),
         jnp.square(params["beta"]).reshape(-1),
         params["g_attn"], params["b_attn"], params["g_freq"], params["b_freq"],
         params["b2"], params["g_ff"], params["b_ff"]],
        axis=0).astype(jnp.float32)
    b1 = params["b1"].reshape(1, inter).astype(jnp.float32)

    x2d = hidden_states.reshape(B * S, H).astype(jnp.float32)
    n_out = n_layers if output_all_encoded_layers else 1

    # --- the fused per-layer kernel ------------------------------------------
    def kernel(x_ref, m_ref, bas_ref, bast_ref, wqkv_ref, wo_ref,
               w1_ref, w2_ref, vech_ref, bqkv_ref, b1_ref, o_ref,
               carry_ref, ctx_ref, low_ref):
        layer = pl.program_id(1)
        n_layer = pl.num_programs(1)

        @pl.when(layer == 0)
        def _():
            carry_ref[...] = x_ref[...]            # load hidden state once per block

        xf = carry_ref[...]                        # (R, H) f32 running hidden state
        vh = vech_ref[...]
        bo, beta_sq = vh[0:1], vh[1:2]
        g_attn, b_attn = vh[2:3], vh[3:4]
        g_freq, b_freq = vh[4:5], vh[5:6]
        b2, g_ff, b_ff = vh[6:7], vh[7:8], vh[8:9]
        mask = m_ref[...]                          # (S, S) additive mask

        def ln(v, g, b, eps):
            mu = jnp.mean(v, axis=-1, keepdims=True)
            var = jnp.mean(jnp.square(v - mu), axis=-1, keepdims=True)
            return (v - mu) * jax.lax.rsqrt(var + eps) * g + b

        def mm(a, w_ref):                          # bf16/f32 operands, f32 accumulate
            return jnp.dot(a.astype(wdt), w_ref[...],
                           preferred_element_type=jnp.float32)

        # ---------------- multi-head self-attention (gsp) --------------------
        qkv = mm(xf, wqkv_ref) + bqkv_ref[...]     # (R, 3H); scale already folded in

        for bl in range(Bt):                       # static unroll over batch rows
            rows = slice(bl * S, (bl + 1) * S)
            for h in range(n_heads):               # static unroll over heads
                qc = slice(h * d, (h + 1) * d)
                kc = slice(H + h * d, H + (h + 1) * d)
                vc = slice(2 * H + h * d, 2 * H + (h + 1) * d)
                qh = qkv[rows, qc].astype(wdt)
                kh = qkv[rows, kc].astype(wdt)
                vhh = qkv[rows, vc].astype(wdt)
                scores = jax.lax.dot_general(
                    qh, kh, (((1,), (1,)), ((), ())),
                    preferred_element_type=jnp.float32) + mask
                scores = scores - jnp.max(scores, axis=-1, keepdims=True)
                ex = jnp.exp(scores)
                probs = ex * pl.reciprocal(jnp.sum(ex, axis=-1, keepdims=True),
                                           approx=True)
                ctx_ref[rows, qc] = jnp.dot(probs.astype(wdt), vhh,
                                            preferred_element_type=jnp.float32)
            # ------------- per-sequence rank-r low-pass projection -----------
            xb = xf[rows, :]
            low_ref[rows, :] = jnp.dot(
                bas_ref[...],
                jnp.dot(bast_ref[...], xb, preferred_element_type=jnp.float32),
                preferred_element_type=jnp.float32)

        attn = mm(ctx_ref[...], wo_ref) + bo
        gsp = ln(attn + xf, g_attn, b_attn, layer_norm_eps)

        # ---------------- frequency (low-pass) layer (dsp) --------------------
        low = low_ref[...]
        freq = low + beta_sq * (xf - low)
        dsp = ln(freq + xf, g_freq, b_freq, 1e-12)  # FrequencyLayer hard-codes 1e-12

        mix = alpha * dsp + (1.0 - alpha) * gsp

        # ---------------- feed-forward ----------------------------------------
        h1 = _tanh_gelu(mm(mix, w1_ref) + b1_ref[...])
        out = ln(mm(h1, w2_ref) + b2 + mix, g_ff, b_ff, layer_norm_eps)

        carry_ref[...] = out                        # layer carry stays in VMEM
        if output_all_encoded_layers:
            o_ref[0] = out                          # every layer is an output
        else:
            @pl.when(layer == n_layer - 1)
            def _():
                o_ref[0] = out                      # write to HBM only once

    # --- specs / VMEM budget ---------------------------------------------------
    const2 = lambda b, l: (0, 0)
    if output_all_encoded_layers:
        out_index = lambda b, l: (l, b, 0)
    else:
        out_index = lambda b, l: (0, b, 0)

    wbytes = 2 if use_bf16 else 4
    vmem_est = (2 * (4 * H * H + 2 * H * inter) * wbytes      # weights (x2 buffers)
                + 2 * (S * S + 2 * S * r_pad + 12 * H + inter) * 4
                + 2 * 2 * R * H * 4                           # x / out blocks
                + 3 * R * H * 4                               # scratches
                + 6 * R * max(3 * H, inter) * 4)              # live intermediates
    vmem_limit = int(min(64 << 20, max(32 << 20, 2 * vmem_est)))

    out = pl.pallas_call(
        kernel,
        out_shape=jax.ShapeDtypeStruct((n_out, B * S, H), jnp.float32),
        grid=(nb, n_layers),
        in_specs=[
            pl.BlockSpec((R, H), lambda b, l: (b, 0)),    # hidden states (2-D)
            pl.BlockSpec((S, S), const2),                 # shared additive mask
            pl.BlockSpec((S, r_pad), const2),             # low-pass basis
            pl.BlockSpec((r_pad, S), const2),             # its transpose
            pl.BlockSpec((H, 3 * H), const2),             # fused Wqkv (Q pre-scaled)
            pl.BlockSpec((H, H), const2),                 # Wo
            pl.BlockSpec((H, inter), const2),             # W1
            pl.BlockSpec((inter, H), const2),             # W2
            pl.BlockSpec((9, H), const2),                 # packed (H,) vectors
            pl.BlockSpec((1, 3 * H), const2),             # fused QKV bias
            pl.BlockSpec((1, inter), const2),             # b1
        ],
        out_specs=pl.BlockSpec((1, R, H), out_index),
        scratch_shapes=[
            pltpu.VMEM((R, H), jnp.float32),              # layer carry
            pltpu.VMEM((R, H), jnp.float32),              # attention contexts
            pltpu.VMEM((R, H), jnp.float32),              # low-pass result
        ],
        compiler_params=pltpu.CompilerParams(
            dimension_semantics=("parallel", "arbitrary"),
            vmem_limit_bytes=vmem_limit),
    )(x2d, ext_mask, basis, basis_t, wqkv, wo, w1, w2, vech, bqkv, b1)

    layers = [hidden_states]
    if output_all_encoded_layers:
        layers += [out[i].reshape(B, S, H) for i in range(n_layers)]
    else:
        layers.append(out[0].reshape(B, S, H))
    return layers


# ----------------------------------------------------------------------------
# Pure-JAX reference (mirrors the PyTorch forward, eval mode) for validation.
# ----------------------------------------------------------------------------
def _ref_ln(v, g, b, eps):
    mu = jnp.mean(v, axis=-1, keepdims=True)
    var = jnp.mean(jnp.square(v - mu), axis=-1, keepdims=True)
    return (v - mu) / jnp.sqrt(var + eps) * g + b


def ref_block(x, mask2d, p, *, n_heads, alpha, c, layer_norm_eps):
    B, S, H = x.shape
    d = H // n_heads
    q = x @ p["wq"] + p["bq"]
    k = x @ p["wk"] + p["bk"]
    v = x @ p["wv"] + p["bv"]
    split = lambda t: t.reshape(B, S, n_heads, d).transpose(0, 2, 1, 3)
    scores = jnp.einsum("bhqd,bhkd->bhqk", split(q), split(k)) / math.sqrt(d)
    scores = scores + mask2d[None, None]
    probs = jax.nn.softmax(scores, axis=-1)
    ctx = jnp.einsum("bhqk,bhkd->bhqd", probs, split(v)).transpose(0, 2, 1, 3)
    ctx = ctx.reshape(B, S, H)
    gsp = _ref_ln(ctx @ p["wo"] + p["bo"] + x, p["g_attn"], p["b_attn"], layer_norm_eps)

    c_half = c // 2 + 1
    xf = jnp.fft.rfft(x, axis=1, norm="ortho")
    keep = (jnp.arange(xf.shape[1]) < c_half)[None, :, None]
    low = jnp.fft.irfft(xf * keep, n=S, axis=1, norm="ortho")
    emb = low + jnp.square(p["beta"]) * (x - low)
    dsp = _ref_ln(emb + x, p["g_freq"], p["b_freq"], 1e-12)

    mix = alpha * dsp + (1.0 - alpha) * gsp
    h1 = _tanh_gelu(mix @ p["w1"] + p["b1"])
    return _ref_ln(h1 @ p["w2"] + p["b2"] + mix, p["g_ff"], p["b_ff"], layer_norm_eps)


def ref_encoder(x, mask2d, p, *, n_layers, **kw):
    for _ in range(n_layers):
        x = ref_block(x, mask2d, p, **kw)
    return x


# ----------------------------------------------------------------------------
if __name__ == "__main__":
    B, S, H, INTER = 2, 8, 32, 64
    N_LAYERS, N_HEADS = 2, 2
    ALPHA, C, LN_EPS = 0.7, 3, 1e-12

    key = jax.random.PRNGKey(0)
    keys = jax.random.split(key, 16)
    nrm = lambda k, shape, s=0.02: (s * jax.random.normal(k, shape)).astype(jnp.float32)

    params = {
        "wq": nrm(keys[0], (H, H)), "bq": nrm(keys[1], (H,)),
        "wk": nrm(keys[2], (H, H)), "bk": nrm(keys[3], (H,)),
        "wv": nrm(keys[4], (H, H)), "bv": nrm(keys[5], (H,)),
        "wo": nrm(keys[6], (H, H)), "bo": nrm(keys[7], (H,)),
        "beta": jax.random.normal(keys[8], (H,)).astype(jnp.float32),  # randn(1,1,H)
        "g_attn": jnp.ones((H,), jnp.float32), "b_attn": jnp.zeros((H,), jnp.float32),
        "g_freq": jnp.ones((H,), jnp.float32), "b_freq": jnp.zeros((H,), jnp.float32),
        "w1": nrm(keys[9], (H, INTER)), "b1": nrm(keys[10], (INTER,)),
        "w2": nrm(keys[11], (INTER, H)), "b2": nrm(keys[12], (H,)),
        "g_ff": jnp.ones((H,), jnp.float32), "b_ff": jnp.zeros((H,), jnp.float32),
    }

    x = jax.random.normal(keys[13], (B, S, H)).astype(jnp.float32)
    # shared causal additive mask (RecBole style): 0 where visible, -10000 elsewhere
    causal = jnp.tril(jnp.ones((S, S), jnp.float32))
    ext_mask = (1.0 - causal) * -10000.0

    ref = ref_encoder(x, ext_mask, params, n_layers=N_LAYERS, n_heads=N_HEADS,
                      alpha=ALPHA, c=C, layer_norm_eps=LN_EPS)

    # full-precision path (tight check)
    out_f32 = bsarec_encoder_pallas(
        x, ext_mask, params, n_layers=N_LAYERS, n_heads=N_HEADS, alpha=ALPHA,
        c=C, layer_norm_eps=LN_EPS, output_all_encoded_layers=False,
        use_bf16=False)[-1]
    out_f32 = jax.block_until_ready(out_f32)
    np.testing.assert_allclose(np.asarray(out_f32), np.asarray(ref),
                               atol=5e-3, rtol=5e-3)

    # bf16-weight fast path (loose check: bf16 matmul operands, f32 accumulation)
    out_bf16 = bsarec_encoder_pallas(
        x, ext_mask, params, n_layers=N_LAYERS, n_heads=N_HEADS, alpha=ALPHA,
        c=C, layer_norm_eps=LN_EPS, output_all_encoded_layers=False,
        use_bf16=True)[-1]
    out_bf16 = jax.block_until_ready(out_bf16)
    np.testing.assert_allclose(np.asarray(out_bf16), np.asarray(ref),
                               atol=3e-2, rtol=3e-2)

    print("KERNEL_OK")
</pallas_src>

<mosaic_0001>
module attributes {stable_mosaic.version = 11 : i64} {
  func.func @kernel(%arg0: i32, %arg1: i32, %arg2: memref<16x32xf32, #tpu.memory_space<vmem>>, %arg3: memref<8x8xf32, #tpu.memory_space<vmem>>, %arg4: memref<8x8xf32, #tpu.memory_space<vmem>>, %arg5: memref<8x8xf32, #tpu.memory_space<vmem>>, %arg6: memref<32x96xf32, #tpu.memory_space<vmem>>, %arg7: memref<32x32xf32, #tpu.memory_space<vmem>>, %arg8: memref<32x64xf32, #tpu.memory_space<vmem>>, %arg9: memref<64x32xf32, #tpu.memory_space<vmem>>, %arg10: memref<9x32xf32, #tpu.memory_space<vmem>>, %arg11: memref<1x96xf32, #tpu.memory_space<vmem>>, %arg12: memref<1x64xf32, #tpu.memory_space<vmem>>, %arg13: memref<1x16x32xf32, #tpu.memory_space<vmem>>, %arg14: memref<16x32xf32, #tpu.memory_space<vmem>>, %arg15: memref<16x32xf32, #tpu.memory_space<vmem>>, %arg16: memref<16x32xf32, #tpu.memory_space<vmem>>) attributes {dimension_semantics = [#tpu.dimension_semantics<parallel>, #tpu.dimension_semantics<arbitrary>], iteration_bounds = array<i64: 1, 2>, scalar_prefetch = 0 : i64, scratch_operands = 3 : i64, tpu.core_type = #tpu.core_type<tc>, window_params = [{transform_indices = @transform_0, window_bounds = array<i64: 16, 32>}, {pipeline_mode = #tpu.pipeline_mode<synchronous>, transform_indices = @transform_1, window_bounds = array<i64: 8, 8>}, {pipeline_mode = #tpu.pipeline_mode<synchronous>, transform_indices = @transform_2, window_bounds = array<i64: 8, 8>}, {pipeline_mode = #tpu.pipeline_mode<synchronous>, transform_indices = @transform_3, window_bounds = array<i64: 8, 8>}, {pipeline_mode = #tpu.pipeline_mode<synchronous>, transform_indices = @transform_4, window_bounds = array<i64: 32, 96>}, {pipeline_mode = #tpu.pipeline_mode<synchronous>, transform_indices = @transform_5, window_bounds = array<i64: 32, 32>}, {pipeline_mode = #tpu.pipeline_mode<synchronous>, transform_indices = @transform_6, window_bounds = array<i64: 32, 64>}, {pipeline_mode = #tpu.pipeline_mode<synchronous>, transform_indices = @transform_7, window_bounds = array<i64: 64, 32>}, {pipeline_mode = #tpu.pipeline_mode<synchronous>, transform_indices = @transform_8, window_bounds = array<i64: 9, 32>}, {pipeline_mode = #tpu.pipeline_mode<synchronous>, transform_indices = @transform_9, window_bounds = array<i64: 1, 96>}, {pipeline_mode = #tpu.pipeline_mode<synchronous>, transform_indices = @transform_10, window_bounds = array<i64: 1, 64>}, {transform_indices = @transform_11, window_bounds = array<i64: 1, 16, 32>}]} {
    %c0_i32 = arith.constant 0 : i32
    %0 = arith.cmpi eq, %arg1, %c0_i32 : i32
    %1 = arith.extui %0 : i1 to i32
    %c0_i32_0 = arith.constant 0 : i32
    %2 = arith.cmpi ne, %1, %c0_i32_0 : i32
    scf.if %2 {
      %c0_87 = arith.constant 0 : index
      %c0_88 = arith.constant 0 : index
      %210 = vector.load %arg2[%c0_87, %c0_88] : memref<16x32xf32, #tpu.memory_space<vmem>>, vector<16x32xf32>
      %c0_89 = arith.constant 0 : index
      %c0_90 = arith.constant 0 : index
      %211 = vector.load %arg14[%c0_89, %c0_90] : memref<16x32xf32, #tpu.memory_space<vmem>>, vector<16x32xf32>
      tpu.vector_store %arg14[%c0_89, %c0_90], %210 {strides = array<i32>} : memref<16x32xf32, #tpu.memory_space<vmem>>, vector<16x32xf32>,
    } else {
    }
    %c0 = arith.constant 0 : index
    %c0_1 = arith.constant 0 : index
    %3 = vector.load %arg14[%c0, %c0_1] : memref<16x32xf32, #tpu.memory_space<vmem>>, vector<16x32xf32>
    %c0_2 = arith.constant 0 : index
    %c0_3 = arith.constant 0 : index
    %4 = vector.load %arg10[%c0_2, %c0_3] : memref<9x32xf32, #tpu.memory_space<vmem>>, vector<9x32xf32>
    %5 = vector.extract_strided_slice %4 {offsets = [0, 0], sizes = [1, 32], strides = [1, 1]} : vector<9x32xf32> to vector<1x32xf32>
    %6 = vector.extract_strided_slice %4 {offsets = [1, 0], sizes = [1, 32], strides = [1, 1]} : vector<9x32xf32> to vector<1x32xf32>
    %7 = vector.extract_strided_slice %4 {offsets = [2, 0], sizes = [1, 32], strides = [1, 1]} : vector<9x32xf32> to vector<1x32xf32>
    %8 = vector.extract_strided_slice %4 {offsets = [3, 0], sizes = [1, 32], strides = [1, 1]} : vector<9x32xf32> to vector<1x32xf32>
    %9 = vector.extract_strided_slice %4 {offsets = [4, 0], sizes = [1, 32], strides = [1, 1]} : vector<9x32xf32> to vector<1x32xf32>
    %10 = vector.extract_strided_slice %4 {offsets = [5, 0], sizes = [1, 32], strides = [1, 1]} : vector<9x32xf32> to vector<1x32xf32>
    %11 = vector.extract_strided_slice %4 {offsets = [6, 0], sizes = [1, 32], strides = [1, 1]} : vector<9x32xf32> to vector<1x32xf32>
    %12 = vector.extract_strided_slice %4 {offsets = [7, 0], sizes = [1, 32], strides = [1, 1]} : vector<9x32xf32> to vector<1x32xf32>
    %13 = vector.extract_strided_slice %4 {offsets = [8, 0], sizes = [1, 32], strides = [1, 1]} : vector<9x32xf32> to vector<1x32xf32>
    %c0_4 = arith.constant 0 : index
    %c0_5 = arith.constant 0 : index
    %14 = vector.load %arg3[%c0_4, %c0_5] : memref<8x8xf32, #tpu.memory_space<vmem>>, vector<8x8xf32>
    %c0_6 = arith.constant 0 : index
    %c0_7 = arith.constant 0 : index
    %15 = vector.load %arg6[%c0_6, %c0_7] : memref<32x96xf32, #tpu.memory_space<vmem>>, vector<32x96xf32>
    %cst = arith.constant dense<0.000000e+00> : vector<16x96xf32>
    %16 = tpu.matmul %3, %15, %cst {dimension_numbers = #tpu.dot_dimension_numbers<[1], [0], [0], [1], [0, 0, 1, 1], [], []>} : vector<16x32xf32>, vector<32x96xf32>, vector<16x96xf32> -> vector<16x96xf32>
    %c0_8 = arith.constant 0 : index
    %c0_9 = arith.constant 0 : index
    %17 = vector.load %arg11[%c0_8, %c0_9] : memref<1x96xf32, #tpu.memory_space<vmem>>, vector<1x96xf32>
    %18 = vector.broadcast %17 : vector<1x96xf32> to vector<16x96xf32>
    %19 = arith.addf %16, %18 : vector<16x96xf32>
    %20 = vector.extract_strided_slice %19 {offsets = [0, 0], sizes = [8, 16], strides = [1, 1]} : vector<16x96xf32> to vector<8x16xf32>
    %21 = vector.extract_strided_slice %19 {offsets = [0, 32], sizes = [8, 16], strides = [1, 1]} : vector<16x96xf32> to vector<8x16xf32>
    %22 = vector.extract_strided_slice %19 {offsets = [0, 64], sizes = [8, 16], strides = [1, 1]} : vector<16x96xf32> to vector<8x16xf32>
    %cst_10 = arith.constant dense<0.000000e+00> : vector<8x8xf32>
    %23 = tpu.matmul %20, %21, %cst_10 {dimension_numbers = #tpu.dot_dimension_numbers<[1], [1], [0], [0], [0, 0, 1, 0], [], []>} : vector<8x16xf32>, vector<8x16xf32>, vector<8x8xf32> -> vector<8x8xf32>
    %24 = arith.addf %23, %14 : vector<8x8xf32>
    %cst_11 = arith.constant dense<0xFF800000> : vector<8xf32>
    %25 = vector.multi_reduction <maximumf>, %24, %cst_11 [1] : vector<8x8xf32> to vector<8xf32>
    %26 = vector.shape_cast %25 : vector<8xf32> to vector<8x1xf32>
    %27 = vector.broadcast %26 : vector<8x1xf32> to vector<8x8xf32>
    %28 = arith.subf %24, %27 : vector<8x8xf32>
    %29 = math.exp %28 : vector<8x8xf32>
    %cst_12 = arith.constant dense<0.000000e+00> : vector<8xf32>
    %30 = vector.multi_reduction <add>, %29, %cst_12 [1] : vector<8x8xf32> to vector<8xf32>
    %31 = vector.shape_cast %30 : vector<8xf32> to vector<8x1xf32>
    %32 = tpu.reciprocal %31 {approx = true} : vector<8x1xf32> -> vector<8x1xf32>
    %33 = vector.broadcast %32 : vector<8x1xf32> to vector<8x8xf32>
    %34 = arith.mulf %29, %33 : vector<8x8xf32>
    %cst_13 = arith.constant dense<0.000000e+00> : vector<8x16xf32>
    %35 = tpu.matmul %34, %22, %cst_13 {dimension_numbers = #tpu.dot_dimension_numbers<[1], [0], [0], [1], [0, 0, 1, 1], [], []>} : vector<8x8xf32>, vector<8x16xf32>, vector<8x16xf32> -> vector<8x16xf32>
    %c0_14 = arith.constant 0 : index
    %c0_15 = arith.constant 0 : index
    %36 = vector.load %arg15[%c0_14, %c0_15] : memref<16x32xf32, #tpu.memory_space<vmem>>, vector<8x16xf32>
    tpu.vector_store %arg15[%c0_14, %c0_15], %35 {strides = array<i32>} : memref<16x32xf32, #tpu.memory_space<vmem>>, vector<8x16xf32>,
    %37 = vector.extract_strided_slice %19 {offsets = [0, 16], sizes = [8, 16], strides = [1, 1]} : vector<16x96xf32> to vector<8x16xf32>
    %38 = vector.extract_strided_slice %19 {offsets = [0, 48], sizes = [8, 16], strides = [1, 1]} : vector<16x96xf32> to vector<8x16xf32>
    %39 = vector.extract_strided_slice %19 {offsets = [0, 80], sizes = [8, 16], strides = [1, 1]} : vector<16x96xf32> to vector<8x16xf32>
    %cst_16 = arith.constant dense<0.000000e+00> : vector<8x8xf32>
    %40 = tpu.matmul %37, %38, %cst_16 {dimension_numbers = #tpu.dot_dimension_numbers<[1], [1], [0], [0], [0, 0, 1, 0], [], []>} : vector<8x16xf32>, vector<8x16xf32>, vector<8x8xf32> -> vector<8x8xf32>
    %41 = arith.addf %40, %14 : vector<8x8xf32>
    %cst_17 = arith.constant dense<0xFF800000> : vector<8xf32>
    %42 = vector.multi_reduction <maximumf>, %41, %cst_17 [1] : vector<8x8xf32> to vector<8xf32>
    %43 = vector.shape_cast %42 : vector<8xf32> to vector<8x1xf32>
    %44 = vector.broadcast %43 : vector<8x1xf32> to vector<8x8xf32>
    %45 = arith.subf %41, %44 : vector<8x8xf32>
    %46 = math.exp %45 : vector<8x8xf32>
    %cst_18 = arith.constant dense<0.000000e+00> : vector<8xf32>
    %47 = vector.multi_reduction <add>, %46, %cst_18 [1] : vector<8x8xf32> to vector<8xf32>
    %48 = vector.shape_cast %47 : vector<8xf32> to vector<8x1xf32>
    %49 = tpu.reciprocal %48 {approx = true} : vector<8x1xf32> -> vector<8x1xf32>
    %50 = vector.broadcast %49 : vector<8x1xf32> to vector<8x8xf32>
    %51 = arith.mulf %46, %50 : vector<8x8xf32>
    %cst_19 = arith.constant dense<0.000000e+00> : vector<8x16xf32>
    %52 = tpu.matmul %51, %39, %cst_19 {dimension_numbers = #tpu.dot_dimension_numbers<[1], [0], [0], [1], [0, 0, 1, 1], [], []>} : vector<8x8xf32>, vector<8x16xf32>, vector<8x16xf32> -> vector<8x16xf32>
    %c0_20 = arith.constant 0 : index
    %c16 = arith.constant 16 : index
    %53 = vector.load %arg15[%c0_20, %c16] : memref<16x32xf32, #tpu.memory_space<vmem>>, vector<8x16xf32>
    tpu.vector_store %arg15[%c0_20, %c16], %52 {strides = array<i32>} : memref<16x32xf32, #tpu.memory_space<vmem>>, vector<8x16xf32>,
    %54 = vector.extract_strided_slice %3 {offsets = [0, 0], sizes = [8, 32], strides = [1, 1]} : vector<16x32xf32> to vector<8x32xf32>
    %c0_21 = arith.constant 0 : index
    %c0_22 = arith.constant 0 : index
    %55 = vector.load %arg4[%c0_21, %c0_22] : memref<8x8xf32, #tpu.memory_space<vmem>>, vector<8x8xf32>
    %c0_23 = arith.constant 0 : index
    %c0_24 = arith.constant 0 : index
    %56 = vector.load %arg5[%c0_23, %c0_24] : memref<8x8xf32, #tpu.memory_space<vmem>>, vector<8x8xf32>
    %cst_25 = arith.constant dense<0.000000e+00> : vector<8x32xf32>
    %57 = tpu.matmul %56, %54, %cst_25 {dimension_numbers = #tpu.dot_dimension_numbers<[1], [0], [0], [1], [0, 0, 1, 1], [], []>} : vector<8x8xf32>, vector<8x32xf32>, vector<8x32xf32> -> vector<8x32xf32>
    %cst_26 = arith.constant dense<0.000000e+00> : vector<8x32xf32>
    %58 = tpu.matmul %55, %57, %cst_26 {dimension_numbers = #tpu.dot_dimension_numbers<[1], [0], [0], [1], [0, 0, 1, 1], [], []>} : vector<8x8xf32>, vector<8x32xf32>, vector<8x32xf32> -> vector<8x32xf32>
    %c0_27 = arith.constant 0 : index
    %c0_28 = arith.constant 0 : index
    %59 = vector.load %arg16[%c0_27, %c0_28] : memref<16x32xf32, #tpu.memory_space<vmem>>, vector<8x32xf32>
    tpu.vector_store %arg16[%c0_27, %c0_28], %58 {strides = array<i32>} : memref<16x32xf32, #tpu.memory_space<vmem>>, vector<8x32xf32>,
    %60 = vector.extract_strided_slice %19 {offsets = [8, 0], sizes = [8, 16], strides = [1, 1]} : vector<16x96xf32> to vector<8x16xf32>
    %61 = vector.extract_strided_slice %19 {offsets = [8, 32], sizes = [8, 16], strides = [1, 1]} : vector<16x96xf32> to vector<8x16xf32>
    %62 = vector.extract_strided_slice %19 {offsets = [8, 64], sizes = [8, 16], strides = [1, 1]} : vector<16x96xf32> to vector<8x16xf32>
    %cst_29 = arith.constant dense<0.000000e+00> : vector<8x8xf32>
    %63 = tpu.matmul %60, %61, %cst_29 {dimension_numbers = #tpu.dot_dimension_numbers<[1], [1], [0], [0], [0, 0, 1, 0], [], []>} : vector<8x16xf32>, vector<8x16xf32>, vector<8x8xf32> -> vector<8x8xf32>
    %64 = arith.addf %63, %14 : vector<8x8xf32>
    %cst_30 = arith.constant dense<0xFF800000> : vector<8xf32>
    %65 = vector.multi_reduction <maximumf>, %64, %cst_30 [1] : vector<8x8xf32> to vector<8xf32>
    %66 = vector.shape_cast %65 : vector<8xf32> to vector<8x1xf32>
    %67 = vector.broadcast %66 : vector<8x1xf32> to vector<8x8xf32>
    %68 = arith.subf %64, %67 : vector<8x8xf32>
    %69 = math.exp %68 : vector<8x8xf32>
    %cst_31 = arith.constant dense<0.000000e+00> : vector<8xf32>
    %70 = vector.multi_reduction <add>, %69, %cst_31 [1] : vector<8x8xf32> to vector<8xf32>
    %71 = vector.shape_cast %70 : vector<8xf32> to vector<8x1xf32>
    %72 = tpu.reciprocal %71 {approx = true} : vector<8x1xf32> -> vector<8x1xf32>
    %73 = vector.broadcast %72 : vector<8x1xf32> to vector<8x8xf32>
    %74 = arith.mulf %69, %73 : vector<8x8xf32>
    %cst_32 = arith.constant dense<0.000000e+00> : vector<8x16xf32>
    %75 = tpu.matmul %74, %62, %cst_32 {dimension_numbers = #tpu.dot_dimension_numbers<[1], [0], [0], [1], [0, 0, 1, 1], [], []>} : vector<8x8xf32>, vector<8x16xf32>, vector<8x16xf32> -> vector<8x16xf32>
    %c8 = arith.constant 8 : index
    %c0_33 = arith.constant 0 : index
    %76 = vector.load %arg15[%c8, %c0_33] : memref<16x32xf32, #tpu.memory_space<vmem>>, vector<8x16xf32>
    tpu.vector_store %arg15[%c8, %c0_33], %75 {strides = array<i32>} : memref<16x32xf32, #tpu.memory_space<vmem>>, vector<8x16xf32>,
    %77 = vector.extract_strided_slice %19 {offsets = [8, 16], sizes = [8, 16], strides = [1, 1]} : vector<16x96xf32> to vector<8x16xf32>
    %78 = vector.extract_strided_slice %19 {offsets = [8, 48], sizes = [8, 16], strides = [1, 1]} : vector<16x96xf32> to vector<8x16xf32>
    %79 = vector.extract_strided_slice %19 {offsets = [8, 80], sizes = [8, 16], strides = [1, 1]} : vector<16x96xf32> to vector<8x16xf32>
    %cst_34 = arith.constant dense<0.000000e+00> : vector<8x8xf32>
    %80 = tpu.matmul %77, %78, %cst_34 {dimension_numbers = #tpu.dot_dimension_numbers<[1], [1], [0], [0], [0, 0, 1, 0], [], []>} : vector<8x16xf32>, vector<8x16xf32>, vector<8x8xf32> -> vector<8x8xf32>
    %81 = arith.addf %80, %14 : vector<8x8xf32>
    %cst_35 = arith.constant dense<0xFF800000> : vector<8xf32>
    %82 = vector.multi_reduction <maximumf>, %81, %cst_35 [1] : vector<8x8xf32> to vector<8xf32>
    %83 = vector.shape_cast %82 : vector<8xf32> to vector<8x1xf32>
    %84 = vector.broadcast %83 : vector<8x1xf32> to vector<8x8xf32>
    %85 = arith.subf %81, %84 : vector<8x8xf32>
    %86 = math.exp %85 : vector<8x8xf32>
    %cst_36 = arith.constant dense<0.000000e+00> : vector<8xf32>
    %87 = vector.multi_reduction <add>, %86, %cst_36 [1] : vector<8x8xf32> to vector<8xf32>
    %88 = vector.shape_cast %87 : vector<8xf32> to vector<8x1xf32>
    %89 = tpu.reciprocal %88 {approx = true} : vector<8x1xf32> -> vector<8x1xf32>
    %90 = vector.broadcast %89 : vector<8x1xf32> to vector<8x8xf32>
    %91 = arith.mulf %86, %90 : vector<8x8xf32>
    %cst_37 = arith.constant dense<0.000000e+00> : vector<8x16xf32>
    %92 = tpu.matmul %91, %79, %cst_37 {dimension_numbers = #tpu.dot_dimension_numbers<[1], [0], [0], [1], [0, 0, 1, 1], [], []>} : vector<8x8xf32>, vector<8x16xf32>, vector<8x16xf32> -> vector<8x16xf32>
    %c8_38 = arith.constant 8 : index
    %c16_39 = arith.constant 16 : index
    %93 = vector.load %arg15[%c8_38, %c16_39] : memref<16x32xf32, #tpu.memory_space<vmem>>, vector<8x16xf32>
    tpu.vector_store %arg15[%c8_38, %c16_39], %92 {strides = array<i32>} : memref<16x32xf32, #tpu.memory_space<vmem>>, vector<8x16xf32>,
    %94 = vector.extract_strided_slice %3 {offsets = [8, 0], sizes = [8, 32], strides = [1, 1]} : vector<16x32xf32> to vector<8x32xf32>
    %c0_40 = arith.constant 0 : index
    %c0_41 = arith.constant 0 : index
    %95 = vector.load %arg4[%c0_40, %c0_41] : memref<8x8xf32, #tpu.memory_space<vmem>>, vector<8x8xf32>
    %c0_42 = arith.constant 0 : index
    %c0_43 = arith.constant 0 : index
    %96 = vector.load %arg5[%c0_42, %c0_43] : memref<8x8xf32, #tpu.memory_space<vmem>>, vector<8x8xf32>
    %cst_44 = arith.constant dense<0.000000e+00> : vector<8x32xf32>
    %97 = tpu.matmul %96, %94, %cst_44 {dimension_numbers = #tpu.dot_dimension_numbers<[1], [0], [0], [1], [0, 0, 1, 1], [], []>} : vector<8x8xf32>, vector<8x32xf32>, vector<8x32xf32> -> vector<8x32xf32>
    %cst_45 = arith.constant dense<0.000000e+00> : vector<8x32xf32>
    %98 = tpu.matmul %95, %97, %cst_45 {dimension_numbers = #tpu.dot_dimension_numbers<[1], [0], [0], [1], [0, 0, 1, 1], [], []>} : vector<8x8xf32>, vector<8x32xf32>, vector<8x32xf32> -> vector<8x32xf32>
    %c8_46 = arith.constant 8 : index
    %c0_47 = arith.constant 0 : index
    %99 = vector.load %arg16[%c8_46, %c0_47] : memref<16x32xf32, #tpu.memory_space<vmem>>, vector<8x32xf32>
    tpu.vector_store %arg16[%c8_46, %c0_47], %98 {strides = array<i32>} : memref<16x32xf32, #tpu.memory_space<vmem>>, vector<8x32xf32>,
    %c0_48 = arith.constant 0 : index
    %c0_49 = arith.constant 0 : index
    %100 = vector.load %arg15[%c0_48, %c0_49] : memref<16x32xf32, #tpu.memory_space<vmem>>, vector<16x32xf32>
    %c0_50 = arith.constant 0 : index
    %c0_51 = arith.constant 0 : index
    %101 = vector.load %arg7[%c0_50, %c0_51] : memref<32x32xf32, #tpu.memory_space<vmem>>, vector<32x32xf32>
    %cst_52 = arith.constant dense<0.000000e+00> : vector<16x32xf32>
    %102 = tpu.matmul %100, %101, %cst_52 {dimension_numbers = #tpu.dot_dimension_numbers<[1], [0], [0], [1], [0, 0, 1, 1], [], []>} : vector<16x32xf32>, vector<32x32xf32>, vector<16x32xf32> -> vector<16x32xf32>
    %103 = vector.broadcast %5 : vector<1x32xf32> to vector<16x32xf32>
    %104 = arith.addf %102, %103 : vector<16x32xf32>
    %105 = arith.addf %104, %3 : vector<16x32xf32>
    %cst_53 = arith.constant dense<0.000000e+00> : vector<16xf32>
    %106 = vector.multi_reduction <add>, %105, %cst_53 [1] : vector<16x32xf32> to vector<16xf32>
    %107 = vector.shape_cast %106 : vector<16xf32> to vector<16x1xf32>
    %cst_54 = arith.constant 3.200000e+01 : f32
    %108 = vector.broadcast %cst_54 : f32 to vector<16x1xf32>
    %109 = arith.divf %107, %108 : vector<16x1xf32>
    %110 = vector.broadcast %109 : vector<16x1xf32> to vector<16x32xf32>
    %111 = arith.subf %105, %110 : vector<16x32xf32>
    %112 = arith.mulf %111, %111 : vector<16x32xf32>
    %cst_55 = arith.constant dense<0.000000e+00> : vector<16xf32>
    %113 = vector.multi_reduction <add>, %112, %cst_55 [1] : vector<16x32xf32> to vector<16xf32>
    %114 = vector.shape_cast %113 : vector<16xf32> to vector<16x1xf32>
    %cst_56 = arith.constant 3.200000e+01 : f32
    %115 = vector.broadcast %cst_56 : f32 to vector<16x1xf32>
    %116 = arith.divf %114, %115 : vector<16x1xf32>
    %117 = vector.broadcast %109 : vector<16x1xf32> to vector<16x32xf32>
    %118 = arith.subf %105, %117 : vector<16x32xf32>
    %cst_57 = arith.constant 9.99999996E-13 : f32
    %119 = vector.broadcast %cst_57 : f32 to vector<16x1xf32>
    %120 = arith.addf %116, %119 : vector<16x1xf32>
    %121 = math.rsqrt %120 : vector<16x1xf32>
    %122 = vector.broadcast %121 : vector<16x1xf32> to vector<16x32xf32>
    %123 = arith.mulf %118, %122 : vector<16x32xf32>
    %124 = vector.broadcast %7 : vector<1x32xf32> to vector<16x32xf32>
    %125 = arith.mulf %123, %124 : vector<16x32xf32>
    %126 = vector.broadcast %8 : vector<1x32xf32> to vector<16x32xf32>
    %127 = arith.addf %125, %126 : vector<16x32xf32>
    %c0_58 = arith.constant 0 : index
    %c0_59 = arith.constant 0 : index
    %128 = vector.load %arg16[%c0_58, %c0_59] : memref<16x32xf32, #tpu.memory_space<vmem>>, vector<16x32xf32>
    %129 = arith.subf %3, %128 : vector<16x32xf32>
    %130 = vector.broadcast %6 : vector<1x32xf32> to vector<16x32xf32>
    %131 = arith.mulf %130, %129 : vector<16x32xf32>
    %132 = arith.addf %128, %131 : vector<16x32xf32>
    %133 = arith.addf %132, %3 : vector<16x32xf32>
    %cst_60 = arith.constant dense<0.000000e+00> : vector<16xf32>
    %134 = vector.multi_reduction <add>, %133, %cst_60 [1] : vector<16x32xf32> to vector<16xf32>
    %135 = vector.shape_cast %134 : vector<16xf32> to vector<16x1xf32>
    %cst_61 = arith.constant 3.200000e+01 : f32
    %136 = vector.broadcast %cst_61 : f32 to vector<16x1xf32>
    %137 = arith.divf %135, %136 : vector<16x1xf32>
    %138 = vector.broadcast %137 : vector<16x1xf32> to vector<16x32xf32>
    %139 = arith.subf %133, %138 : vector<16x32xf32>
    %140 = arith.mulf %139, %139 : vector<16x32xf32>
    %cst_62 = arith.constant dense<0.000000e+00> : vector<16xf32>
    %141 = vector.multi_reduction <add>, %140, %cst_62 [1] : vector<16x32xf32> to vector<16xf32>
    %142 = vector.shape_cast %141 : vector<16xf32> to vector<16x1xf32>
    %cst_63 = arith.constant 3.200000e+01 : f32
    %143 = vector.broadcast %cst_63 : f32 to vector<16x1xf32>
    %144 = arith.divf %142, %143 : vector<16x1xf32>
    %145 = vector.broadcast %137 : vector<16x1xf32> to vector<16x32xf32>
    %146 = arith.subf %133, %145 : vector<16x32xf32>
    %cst_64 = arith.constant 9.99999996E-13 : f32
    %147 = vector.broadcast %cst_64 : f32 to vector<16x1xf32>
    %148 = arith.addf %144, %147 : vector<16x1xf32>
    %149 = math.rsqrt %148 : vector<16x1xf32>
    %150 = vector.broadcast %149 : vector<16x1xf32> to vector<16x32xf32>
    %151 = arith.mulf %146, %150 : vector<16x32xf32>
    %152 = vector.broadcast %9 : vector<1x32xf32> to vector<16x32xf32>
    %153 = arith.mulf %151, %152 : vector<16x32xf32>
    %154 = vector.broadcast %10 : vector<1x32xf32> to vector<16x32xf32>
    %155 = arith.addf %153, %154 : vector<16x32xf32>
    %cst_65 = arith.constant 0.699999988 : f32
    %156 = vector.broadcast %cst_65 : f32 to vector<16x32xf32>
    %157 = arith.mulf %156, %155 : vector<16x32xf32>
    %cst_66 = arith.constant 3.000000e-01 : f32
    %158 = vector.broadcast %cst_66 : f32 to vector<16x32xf32>
    %159 = arith.mulf %158, %127 : vector<16x32xf32>
    %160 = arith.addf %157, %159 : vector<16x32xf32>
    %c0_67 = arith.constant 0 : index
    %c0_68 = arith.constant 0 : index
    %161 = vector.load %arg8[%c0_67, %c0_68] : memref<32x64xf32, #tpu.memory_space<vmem>>, vector<32x64xf32>
    %cst_69 = arith.constant dense<0.000000e+00> : vector<16x64xf32>
    %162 = tpu.matmul %160, %161, %cst_69 {dimension_numbers = #tpu.dot_dimension_numbers<[1], [0], [0], [1], [0, 0, 1, 1], [], []>} : vector<16x32xf32>, vector<32x64xf32>, vector<16x64xf32> -> vector<16x64xf32>
    %c0_70 = arith.constant 0 : index
    %c0_71 = arith.constant 0 : index
    %163 = vector.load %arg12[%c0_70, %c0_71] : memref<1x64xf32, #tpu.memory_space<vmem>>, vector<1x64xf32>
    %164 = vector.broadcast %163 : vector<1x64xf32> to vector<16x64xf32>
    %165 = arith.addf %162, %164 : vector<16x64xf32>
    %cst_72 = arith.constant 5.000000e-01 : f32
    %166 = vector.broadcast %cst_72 : f32 to vector<16x64xf32>
    %167 = arith.mulf %166, %165 : vector<16x64xf32>
    %cst_73 = arith.constant 4.471500e-02 : f32
    %168 = vector.broadcast %cst_73 : f32 to vector<16x64xf32>
    %169 = arith.mulf %168, %165 : vector<16x64xf32>
    %170 = arith.mulf %169, %165 : vector<16x64xf32>
    %171 = arith.mulf %170, %165 : vector<16x64xf32>
    %172 = arith.addf %165, %171 : vector<16x64xf32>
    %cst_74 = arith.constant 0.797884583 : f32
    %173 = vector.broadcast %cst_74 : f32 to vector<16x64xf32>
    %174 = arith.mulf %173, %172 : vector<16x64xf32>
    %175 = math.tanh %174 : vector<16x64xf32>
    %cst_75 = arith.constant 1.000000e+00 : f32
    %176 = vector.broadcast %cst_75 : f32 to vector<16x64xf32>
    %177 = arith.addf %176, %175 : vector<16x64xf32>
    %178 = arith.mulf %167, %177 : vector<16x64xf32>
    %c0_76 = arith.constant 0 : index
    %c0_77 = arith.constant 0 : index
    %179 = vector.load %arg9[%c0_76, %c0_77] : memref<64x32xf32, #tpu.memory_space<vmem>>, vector<64x32xf32>
    %cst_78 = arith.constant dense<0.000000e+00> : vector<16x32xf32>
    %180 = tpu.matmul %178, %179, %cst_78 {dimension_numbers = #tpu.dot_dimension_numbers<[1], [0], [0], [1], [0, 0, 1, 1], [], []>} : vector<16x64xf32>, vector<64x32xf32>, vector<16x32xf32> -> vector<16x32xf32>
    %181 = vector.broadcast %11 : vector<1x32xf32> to vector<16x32xf32>
    %182 = arith.addf %180, %181 : vector<16x32xf32>
    %183 = arith.addf %182, %160 : vector<16x32xf32>
    %cst_79 = arith.constant dense<0.000000e+00> : vector<16xf32>
    %184 = vector.multi_reduction <add>, %183, %cst_79 [1] : vector<16x32xf32> to vector<16xf32>
    %185 = vector.shape_cast %184 : vector<16xf32> to vector<16x1xf32>
    %cst_80 = arith.constant 3.200000e+01 : f32
    %186 = vector.broadcast %cst_80 : f32 to vector<16x1xf32>
    %187 = arith.divf %185, %186 : vector<16x1xf32>
    %188 = vector.broadcast %187 : vector<16x1xf32> to vector<16x32xf32>
    %189 = arith.subf %183, %188 : vector<16x32xf32>
    %190 = arith.mulf %189, %189 : vector<16x32xf32>
    %cst_81 = arith.constant dense<0.000000e+00> : vector<16xf32>
    %191 = vector.multi_reduction <add>, %190, %cst_81 [1] : vector<16x32xf32> to vector<16xf32>
    %192 = vector.shape_cast %191 : vector<16xf32> to vector<16x1xf32>
    %cst_82 = arith.constant 3.200000e+01 : f32
    %193 = vector.broadcast %cst_82 : f32 to vector<16x1xf32>
    %194 = arith.divf %192, %193 : vector<16x1xf32>
    %195 = vector.broadcast %187 : vector<16x1xf32> to vector<16x32xf32>
    %196 = arith.subf %183, %195 : vector<16x32xf32>
    %cst_83 = arith.constant 9.99999996E-13 : f32
    %197 = vector.broadcast %cst_83 : f32 to vector<16x1xf32>
    %198 = arith.addf %194, %197 : vector<16x1xf32>
    %199 = math.rsqrt %198 : vector<16x1xf32>
    %200 = vector.broadcast %199 : vector<16x1xf32> to vector<16x32xf32>
    %201 = arith.mulf %196, %200 : vector<16x32xf32>
    %202 = vector.broadcast %12 : vector<1x32xf32> to vector<16x32xf32>
    %203 = arith.mulf %201, %202 : vector<16x32xf32>
    %204 = vector.broadcast %13 : vector<1x32xf32> to vector<16x32xf32>
    %205 = arith.addf %203, %204 : vector<16x32xf32>
    %c0_84 = arith.constant 0 : index
    %c0_85 = arith.constant 0 : index
    %206 = vector.load %arg14[%c0_84, %c0_85] : memref<16x32xf32, #tpu.memory_space<vmem>>, vector<16x32xf32>
    tpu.vector_store %arg14[%c0_84, %c0_85], %205 {strides = array<i32>} : memref<16x32xf32, #tpu.memory_space<vmem>>, vector<16x32xf32>,
    %c1_i32 = arith.constant 1 : i32
    %207 = arith.cmpi eq, %arg1, %c1_i32 : i32
    %208 = arith.extui %207 : i1 to i32
    %c0_i32_86 = arith.constant 0 : i32
    %209 = arith.cmpi ne, %208, %c0_i32_86 : i32
    scf.if %209 {
      %c0_87 = arith.constant 0 : index
      %c0_88 = arith.constant 0 : index
      %c0_89 = arith.constant 0 : index
      %210 = vector.load %arg13[%c0_87, %c0_88, %c0_89] : memref<1x16x32xf32, #tpu.memory_space<vmem>>, vector<1x16x32xf32>
      %211 = vector.shape_cast %210 : vector<1x16x32xf32> to vector<16x32xf32>
      %212 = vector.shape_cast %205 : vector<16x32xf32> to vector<1x16x32xf32>
      tpu.vector_store %arg13[%c0_87, %c0_88, %c0_89], %212 {strides = array<i32>} : memref<1x16x32xf32, #tpu.memory_space<vmem>>, vector<1x16x32xf32>,
    } else {
    }
    return
  }
  func.func @transform_0(%arg0: i32, %arg1: i32) -> (i32, i32) {
    %c0_i32 = arith.constant 0 : i32
    %c0_i32_0 = arith.constant 0 : i32
    return %arg0, %c0_i32 : i32, i32
  }
  func.func @transform_1(%arg0: i32, %arg1: i32) -> (i32, i32) {
    %c0_i32 = arith.constant 0 : i32
    %c0_i32_0 = arith.constant 0 : i32
    %c0_i32_1 = arith.constant 0 : i32
    return %c0_i32, %c0_i32_0 : i32, i32
  }
  func.func @transform_2(%arg0: i32, %arg1: i32) -> (i32, i32) {
    %c0_i32 = arith.constant 0 : i32
    %c0_i32_0 = arith.constant 0 : i32
    %c0_i32_1 = arith.constant 0 : i32
    return %c0_i32, %c0_i32_0 : i32, i32
  }
  func.func @transform_3(%arg0: i32, %arg1: i32) -> (i32, i32) {
    %c0_i32 = arith.constant 0 : i32
    %c0_i32_0 = arith.constant 0 : i32
    %c0_i32_1 = arith.constant 0 : i32
    return %c0_i32, %c0_i32_0 : i32, i32
  }
  func.func @transform_4(%arg0: i32, %arg1: i32) -> (i32, i32) {
    %c0_i32 = arith.constant 0 : i32
    %c0_i32_0 = arith.constant 0 : i32
    %c0_i32_1 = arith.constant 0 : i32
    return %c0_i32, %c0_i32_0 : i32, i32
  }
  func.func @transform_5(%arg0: i32, %arg1: i32) -> (i32, i32) {
    %c0_i32 = arith.constant 0 : i32
    %c0_i32_0 = arith.constant 0 : i32
    %c0_i32_1 = arith.constant 0 : i32
    return %c0_i32, %c0_i32_0 : i32, i32
  }
  func.func @transform_6(%arg0: i32, %arg1: i32) -> (i32, i32) {
    %c0_i32 = arith.constant 0 : i32
    %c0_i32_0 = arith.constant 0 : i32
    %c0_i32_1 = arith.constant 0 : i32
    return %c0_i32, %c0_i32_0 : i32, i32
  }
  func.func @transform_7(%arg0: i32, %arg1: i32) -> (i32, i32) {
    %c0_i32 = arith.constant 0 : i32
    %c0_i32_0 = arith.constant 0 : i32
    %c0_i32_1 = arith.constant 0 : i32
    return %c0_i32, %c0_i32_0 : i32, i32
  }
  func.func @transform_8(%arg0: i32, %arg1: i32) -> (i32, i32) {
    %c0_i32 = arith.constant 0 : i32
    %c0_i32_0 = arith.constant 0 : i32
    %c0_i32_1 = arith.constant 0 : i32
    return %c0_i32, %c0_i32_0 : i32, i32
  }
  func.func @transform_9(%arg0: i32, %arg1: i32) -> (i32, i32) {
    %c0_i32 = arith.constant 0 : i32
    %c0_i32_0 = arith.constant 0 : i32
    %c0_i32_1 = arith.constant 0 : i32
    return %c0_i32, %c0_i32_0 : i32, i32
  }
  func.func @transform_10(%arg0: i32, %arg1: i32) -> (i32, i32) {
    %c0_i32 = arith.constant 0 : i32
    %c0_i32_0 = arith.constant 0 : i32
    %c0_i32_1 = arith.constant 0 : i32
    return %c0_i32, %c0_i32_0 : i32, i32
  }
  func.func @transform_11(%arg0: i32, %arg1: i32) -> (i32, i32, i32) {
    %c0_i32 = arith.constant 0 : i32
    %c0_i32_0 = arith.constant 0 : i32
    %c0_i32_1 = arith.constant 0 : i32
    return %c0_i32, %arg0, %c0_i32_0 : i32, i32, i32
  }
}

</mosaic_0001>

<llo_original>
// kernel: tpu_custom_call.1
$region0: #{tpu_custom_call.1}
  #allocation0 [shape = 'u32[]', space=smem, size = 0x4, offset = 0x4, fixed_abs, tag = 'smem constant byte address 0x4 - core index']
  #allocation1 [shape = 'u32[72,128]{1,0:T(1,128)}', space=vmem, size = 0x9000, scoped, tag = 'internal scratch']
  #allocation2 [shape = 'f32[16,32]{1,0:T(8,128)}', space=vmem, size = 0x2000, scoped, tag = 'scratch operand']
  #allocation3 [shape = 'f32[16,32]{1,0:T(8,128)}', space=vmem, size = 0x2000, scoped, tag = 'scratch operand']
  #allocation4 [shape = 'f32[16,32]{1,0:T(8,128)}', space=vmem, size = 0x2000, scoped, tag = 'scratch operand']
  %s0 = inlined_call_operand.hbm [shape: f32[16,32], index: 0, kind: input, shape index: {}]
  %s1 = inlined_call_operand.hbm [shape: f32[8,8], index: 1, kind: input, shape index: {}]
  %s2 = inlined_call_operand.hbm [shape: f32[8,8], index: 2, kind: input, shape index: {}]
  %s3 = inlined_call_operand.hbm [shape: f32[8,8], index: 3, kind: input, shape index: {}]
  %s4 = inlined_call_operand.vmem [shape: f32[32,96], index: 4, kind: input, shape index: {}]
  %s5 = inlined_call_operand.vmem [shape: f32[32,32], index: 5, kind: input, shape index: {}]
  %s6 = inlined_call_operand.vmem [shape: f32[32,64], index: 6, kind: input, shape index: {}]
  %s7 = inlined_call_operand.vmem [shape: f32[64,32], index: 7, kind: input, shape index: {}]
  %s8 = inlined_call_operand.hbm [shape: f32[9,32], index: 8, kind: input, shape index: {}]
  %s9 = inlined_call_operand.vmem [shape: f32[1,96], index: 9, kind: input, shape index: {}]
  %s10 = inlined_call_operand.vmem [shape: f32[1,64], index: 10, kind: input, shape index: {}]
  %s11 = inlined_call_operand.hbm [shape: f32[1,16,32], index: 11, kind: output, shape index: {}]
  %s12 = sld [smem:[#allocation0]]
  $region105: #{tpu_custom_call.1} parent=0
    _
  %s14 = ssub.s32 1, %s12
  %s15 = scalar_select 0, %s14, %s12
  $region1: #{tpu_custom_call.1} parent=0
    #allocation5 [shape = 'u8[8192]{0}', space=vmem, size = 0x2000, scoped, tag = 'input window, operand 0, single buffered']
    #allocation6 [shape = 's32[2]{0}', space=sflag, size = 0x8, scoped, tag = 'scoped memory for tpu_custom_call.1']
    #allocation7 [shape = 's32[2]{0}', space=sflag, size = 0x8, scoped, tag = 'scoped memory for tpu_custom_call.1']
    #allocation8 [shape = 'u8[4096]{0}', space=vmem, size = 0x1000, scoped, tag = 'input window, operand 1, single buffered']
    #allocation9 [shape = 's32[1]{0}', space=sflag, size = 0x4, scoped, tag = 'scoped memory for tpu_custom_call.1']
    #allocation10 [shape = 'u8[4096]{0}', space=vmem, size = 0x1000, scoped, tag = 'input window, operand 2, single buffered']
    #allocation11 [shape = 'u8[4096]{0}', space=vmem, size = 0x1000, scoped, tag = 'input window, operand 3, single buffered']
    #allocation12 [shape = 's32[1]{0}', space=sflag, size = 0x4, scoped, tag = 'scoped memory for tpu_custom_call.1']
    #allocation13 [shape = 'u8[8192]{0}', space=vmem, size = 0x2000, scoped, tag = 'input window, operand 8, single buffered']
    #allocation14 [shape = 'u8[8192]{0}', space=vmem, size = 0x2000, scoped, tag = 'output window, operand 0, single buffered']
    %16 = vsyncpa [#allocation6], 0
    %17 = vsyncpa [#allocation9], 0
    %18 = vsyncpa [#allocation12], 0
    %19 = vsyncpa [#allocation7], 0
    loop: start=0, step=1, limit=4
    $region2: #{tpu_custom_call.1} parent=1 // loop_pre_header
      _
    $region3: #{tpu_custom_call.1} parent=1 // loop_header
      %s21 = sphi 0, %s25
      %p22 = scmp.ge.s32.totalorder %s21, 4
      %s28 = sphi 0, %s40
      %s29 = sphi 0, %s36
      %s30 = sphi 0, %s28
      %s31 = sphi 0, %s29
      %s32 = sphi 0, %s30
      %s33 = sphi 0, %s31
      %s43 = sphi 0, %s45
      %s46 = sphi 0, %s43
      %s47 = sphi 0, %s46
      %s63 = sphi 0, %s47
      %s67 = sphi 0, %s67
      %s69 = sphi 0, %s67
      %s70 = sphi 0, %s69
      %s84 = sphi 0, %s70
      %s88 = sphi 0, %s88
      %s90 = sphi 0, %s88
      %s91 = sphi 0, %s90
      %s105 = sphi 0, %s91
      %s109 = sphi 0, %s109
      %s111 = sphi 0, %s109
      %s112 = sphi 0, %s111
      %s126 = sphi 0, %s112
      %s130 = sphi 0, %s130
      %s132 = sphi 0, %s130
      %s133 = sphi 0, %s132
      %s147 = sphi 0, %s133
      %s151 = sphi 0, %s151
      %s153 = sphi 0, %s151
      %s154 = sphi 0, %s153
      %s168 = sphi 0, %s154
      %s172 = sphi 0, %s172
      %s174 = sphi 0, %s172
      %s175 = sphi 0, %s174
      %s189 = sphi 0, %s175
      %s193 = sphi 0, %s193
      %s195 = sphi 0, %s193
      %s196 = sphi 0, %s195
      %s210 = sphi 0, %s196
      %s214 = sphi 0, %s214
      %s216 = sphi 0, %s214
      %s217 = sphi 0, %s216
      %s231 = sphi 0, %s217
      %s235 = sphi 0, %s235
      %s237 = sphi 0, %s235
      %s238 = sphi 0, %s237
      %s252 = sphi 0, %s238
      %s256 = sphi 0, %s256
      %s258 = sphi 0, %s256
      %s259 = sphi 0, %s258
      %s273 = sphi 0, %s259
      %s279 = sphi 0, %s281
      %s282 = sphi 0, %s279
      %s283 = sphi 0, %s282
      %s299 = sphi 0, %s283
    $region4: #{tpu_custom_call.1} parent=1 // loop_header_branch
      %24 = sbr.rel (%p22) target = $region8
    $region5: #{tpu_custom_call.1} parent=1 // loop_body
      %s26 = ssub.s32 %s21, 1
      %s27 = ssub.s32 %s21, 2
      %s34 = sadd.s32 1, %s29
      %p35 = scmp.ge.s32.totalorder %s34, 2
      %s36 = scalar_select %p35, 0, %s34
      %s37 = sadd.s32 1, %s28
      %s38 = scalar_select %p35, %s37, %s28
      %p39 = scmp.ge.s32.totalorder %s38, 1
      %s40 = scalar_select %p39, 0, %s38
      %s41 = ssub.s32 %s28, %s40
      %p42 = scmp.eq.s32.totalorder %s41, 0
      %s44 = sadd.s32 %s43, 1
      %s45 = scalar_select %p42, %s43, %s44
      %p48 = pneg %p42
      %p49 = scmp.eq.s32.totalorder %s21, 1
      %p50 = por %p48, %p49
      %p51 = scmp.ne.s32.totalorder %s43, %s46
      %p52 = scmp.eq.s32.totalorder %s21, 0
      %p53 = por %p51, %p52
      %p54 = scmp.ne.s32.totalorder %s43, %s46
      %p55 = scmp.eq.s32.totalorder %s26, 1
      %p56 = por %p54, %p55
      %p57 = scmp.ne.s32.totalorder %s46, %s47
      %p58 = scmp.eq.s32.totalorder %s26, 0
      %p59 = por %p57, %p58
      %p60 = scmp.ne.s32.totalorder %s46, %s47
      %p61 = scmp.eq.s32.totalorder %s27, 1
      %p62 = por %p60, %p61
      %p64 = scmp.ne.s32.totalorder %s47, %s63
      %p65 = scmp.eq.s32.totalorder %s27, 0
      %p66 = por %p64, %p65
      %s68 = sadd.s32 %s67, 1
      %p71 = scmp.eq.s32.totalorder %s21, 1
      %p72 = scmp.ne.s32.totalorder %s67, %s69
      %p73 = scmp.eq.s32.totalorder %s21, 0
      %p74 = por %p72, %p73
      %p75 = scmp.ne.s32.totalorder %s67, %s69
      %p76 = scmp.eq.s32.totalorder %s26, 1
      %p77 = por %p75, %p76
      %p78 = scmp.ne.s32.totalorder %s69, %s70
      %p79 = scmp.eq.s32.totalorder %s26, 0
      %p80 = por %p78, %p79
      %p81 = scmp.ne.s32.totalorder %s69, %s70
      %p82 = scmp.eq.s32.totalorder %s27, 1
      %p83 = por %p81, %p82
      %p85 = scmp.ne.s32.totalorder %s70, %s84
      %p86 = scmp.eq.s32.totalorder %s27, 0
      %p87 = por %p85, %p86
      %s89 = sadd.s32 %s88, 1
      %p92 = scmp.eq.s32.totalorder %s21, 1
      %p93 = scmp.ne.s32.totalorder %s88, %s90
      %p94 = scmp.eq.s32.totalorder %s21, 0
      %p95 = por %p93, %p94
      %p96 = scmp.ne.s32.totalorder %s88, %s90
      %p97 = scmp.eq.s32.totalorder %s26, 1
      %p98 = por %p96, %p97
      %p99 = scmp.ne.s32.totalorder %s90, %s91
      %p100 = scmp.eq.s32.totalorder %s26, 0
      %p101 = por %p99, %p100
      %p102 = scmp.ne.s32.totalorder %s90, %s91
      %p103 = scmp.eq.s32.totalorder %s27, 1
      %p104 = por %p102, %p103
      %p106 = scmp.ne.s32.totalorder %s91, %s105
      %p107 = scmp.eq.s32.totalorder %s27, 0
      %p108 = por %p106, %p107
      %s110 = sadd.s32 %s109, 1
      %p113 = scmp.eq.s32.totalorder %s21, 1
      %p114 = scmp.ne.s32.totalorder %s109, %s111
      %p115 = scmp.eq.s32.totalorder %s21, 0
      %p116 = por %p114, %p115
      %p117 = scmp.ne.s32.totalorder %s109, %s111
      %p118 = scmp.eq.s32.totalorder %s26, 1
      %p119 = por %p117, %p118
      %p120 = scmp.ne.s32.totalorder %s111, %s112
      %p121 = scmp.eq.s32.totalorder %s26, 0
      %p122 = por %p120, %p121
      %p123 = scmp.ne.s32.totalorder %s111, %s112
      %p124 = scmp.eq.s32.totalorder %s27, 1
      %p125 = por %p123, %p124
      %p127 = scmp.ne.s32.totalorder %s112, %s126
      %p128 = scmp.eq.s32.totalorder %s27, 0
      %p129 = por %p127, %p128
      %s131 = sadd.s32 %s130, 1
      %p134 = scmp.eq.s32.totalorder %s21, 1
      %p135 = scmp.ne.s32.totalorder %s130, %s132
      %p136 = scmp.eq.s32.totalorder %s21, 0
      %p137 = por %p135, %p136
      %p138 = scmp.ne.s32.totalorder %s130, %s132
      %p139 = scmp.eq.s32.totalorder %s26, 1
      %p140 = por %p138, %p139
      %p141 = scmp.ne.s32.totalorder %s132, %s133
      %p142 = scmp.eq.s32.totalorder %s26, 0
      %p143 = por %p141, %p142
      %p144 = scmp.ne.s32.totalorder %s132, %s133
      %p145 = scmp.eq.s32.totalorder %s27, 1
      %p146 = por %p144, %p145
      %p148 = scmp.ne.s32.totalorder %s133, %s147
      %p149 = scmp.eq.s32.totalorder %s27, 0
      %p150 = por %p148, %p149
      %s152 = sadd.s32 %s151, 1
      %p155 = scmp.eq.s32.totalorder %s21, 1
      %p156 = scmp.ne.s32.totalorder %s151, %s153
      %p157 = scmp.eq.s32.totalorder %s21, 0
      %p158 = por %p156, %p157
      %p159 = scmp.ne.s32.totalorder %s151, %s153
      %p160 = scmp.eq.s32.totalorder %s26, 1
      %p161 = por %p159, %p160
      %p162 = scmp.ne.s32.totalorder %s153, %s154
      %p163 = scmp.eq.s32.totalorder %s26, 0
      %p164 = por %p162, %p163
      %p165 = scmp.ne.s32.totalorder %s153, %s154
      %p166 = scmp.eq.s32.totalorder %s27, 1
      %p167 = por %p165, %p166
      %p169 = scmp.ne.s32.totalorder %s154, %s168
      %p170 = scmp.eq.s32.totalorder %s27, 0
      %p171 = por %p169, %p170
      %s173 = sadd.s32 %s172, 1
      %p176 = scmp.eq.s32.totalorder %s21, 1
      %p177 = scmp.ne.s32.totalorder %s172, %s174
      %p178 = scmp.eq.s32.totalorder %s21, 0
      %p179 = por %p177, %p178
      %p180 = scmp.ne.s32.totalorder %s172, %s174
      %p181 = scmp.eq.s32.totalorder %s26, 1
      %p182 = por %p180, %p181
      %p183 = scmp.ne.s32.totalorder %s174, %s175
      %p184 = scmp.eq.s32.totalorder %s26, 0
      %p185 = por %p183, %p184
      %p186 = scmp.ne.s32.totalorder %s174, %s175
      %p187 = scmp.eq.s32.totalorder %s27, 1
      %p188 = por %p186, %p187
      %p190 = scmp.ne.s32.totalorder %s175, %s189
      %p191 = scmp.eq.s32.totalorder %s27, 0
      %p192 = por %p190, %p191
      %s194 = sadd.s32 %s193, 1
      %p197 = scmp.eq.s32.totalorder %s21, 1
      %p198 = scmp.ne.s32.totalorder %s193, %s195
      %p199 = scmp.eq.s32.totalorder %s21, 0
      %p200 = por %p198, %p199
      %p201 = scmp.ne.s32.totalorder %s193, %s195
      %p202 = scmp.eq.s32.totalorder %s26, 1
      %p203 = por %p201, %p202
      %p204 = scmp.ne.s32.totalorder %s195, %s196
      %p205 = scmp.eq.s32.totalorder %s26, 0
      %p206 = por %p204, %p205
      %p207 = scmp.ne.s32.totalorder %s195, %s196
      %p208 = scmp.eq.s32.totalorder %s27, 1
      %p209 = por %p207, %p208
      %p211 = scmp.ne.s32.totalorder %s196, %s210
      %p212 = scmp.eq.s32.totalorder %s27, 0
      %p213 = por %p211, %p212
      %s215 = sadd.s32 %s214, 1
      %p218 = scmp.eq.s32.totalorder %s21, 1
      %p219 = scmp.ne.s32.totalorder %s214, %s216
      %p220 = scmp.eq.s32.totalorder %s21, 0
      %p221 = por %p219, %p220
      %p222 = scmp.ne.s32.totalorder %s214, %s216
      %p223 = scmp.eq.s32.totalorder %s26, 1
      %p224 = por %p222, %p223
      %p225 = scmp.ne.s32.totalorder %s216, %s217
      %p226 = scmp.eq.s32.totalorder %s26, 0
      %p227 = por %p225, %p226
      %p228 = scmp.ne.s32.totalorder %s216, %s217
      %p229 = scmp.eq.s32.totalorder %s27, 1
      %p230 = por %p228, %p229
      %p232 = scmp.ne.s32.totalorder %s217, %s231
      %p233 = scmp.eq.s32.totalorder %s27, 0
      %p234 = por %p232, %p233
      %s236 = sadd.s32 %s235, 1
      %p239 = scmp.eq.s32.totalorder %s21, 1
      %p240 = scmp.ne.s32.totalorder %s235, %s237
      %p241 = scmp.eq.s32.totalorder %s21, 0
      %p242 = por %p240, %p241
      %p243 = scmp.ne.s32.totalorder %s235, %s237
      %p244 = scmp.eq.s32.totalorder %s26, 1
      %p245 = por %p243, %p244
      %p246 = scmp.ne.s32.totalorder %s237, %s238
      %p247 = scmp.eq.s32.totalorder %s26, 0
      %p248 = por %p246, %p247
      %p249 = scmp.ne.s32.totalorder %s237, %s238
      %p250 = scmp.eq.s32.totalorder %s27, 1
      %p251 = por %p249, %p250
      %p253 = scmp.ne.s32.totalorder %s238, %s252
      %p254 = scmp.eq.s32.totalorder %s27, 0
      %p255 = por %p253, %p254
      %s257 = sadd.s32 %s256, 1
      %p260 = scmp.eq.s32.totalorder %s21, 1
      %p261 = scmp.ne.s32.totalorder %s256, %s258
      %p262 = scmp.eq.s32.totalorder %s21, 0
      %p263 = por %p261, %p262
      %p264 = scmp.ne.s32.totalorder %s256, %s258
      %p265 = scmp.eq.s32.totalorder %s26, 1
      %p266 = por %p264, %p265
      %p267 = scmp.ne.s32.totalorder %s258, %s259
      %p268 = scmp.eq.s32.totalorder %s26, 0
      %p269 = por %p267, %p268
      %p270 = scmp.ne.s32.totalorder %s258, %s259
      %p271 = scmp.eq.s32.totalorder %s27, 1
      %p272 = por %p270, %p271
      %p274 = scmp.ne.s32.totalorder %s259, %s273
      %p275 = scmp.eq.s32.totalorder %s27, 0
      %p276 = por %p274, %p275
      %s277 = ssub.s32 %s28, %s40
      %p278 = scmp.eq.s32.totalorder %s277, 0
      %s280 = sadd.s32 %s279, 1
      %s281 = scalar_select %p278, %s279, %s280
      %p284 = pneg %p278
      %p285 = scmp.eq.s32.totalorder %s21, 1
      %p286 = por %p284, %p285
      %p287 = scmp.ne.s32.totalorder %s279, %s282
      %p288 = scmp.eq.s32.totalorder %s21, 0
      %p289 = por %p287, %p288
      %p290 = scmp.ne.s32.totalorder %s279, %s282
      %p291 = scmp.eq.s32.totalorder %s26, 1
      %p292 = por %p290, %p291
      %p293 = scmp.ne.s32.totalorder %s282, %s283
      %p294 = scmp.eq.s32.totalorder %s26, 0
      %p295 = por %p293, %p294
      %p296 = scmp.ne.s32.totalorder %s282, %s283
      %p297 = scmp.eq.s32.totalorder %s27, 1
      %p298 = por %p296, %p297
      %p300 = scmp.ne.s32.totalorder %s283, %s299
      %p301 = scmp.eq.s32.totalorder %s27, 0
      %p302 = por %p300, %p301
      %p303 = scmp.le.s32.totalorder 1, %s21
      %p304 = scmp.lt.s32.totalorder %s21, 3
      %p305 = pnand %p303, %p304
      %p306 = pneg %p305
      // Predicated region
      $region9: #{tpu_custom_call.1} parent=5 // pred_check
        _
      $region10: #{tpu_custom_call.1} parent=5 // pred_check_branch
        %308 = sbr.rel (%p305) target = $region12
      $region11: #{tpu_custom_call.1} parent=5 // pred_region
        %s309 = ssub.s32 %s21, 1
        // Predicated region
        $region13: #{tpu_custom_call.1} parent=11 // pred_check
          %p310 = pneg %p59
        $region14: #{tpu_custom_call.1} parent=11 // pred_check_branch
          %312 = sbr.rel (%p310) target = $region16
        $region15: #{tpu_custom_call.1} parent=11 // pred_region
          %s313 = smul.u32 2, %s30
          %315 = vsyncadd [#allocation6], 0
          %s316 = smul.addr %s313, 8
          %s317 = scalar_lea.hbm %s0, %s316
          %s318 = sshll.u32 %s317, 4
          %s319 = int_to_ptr.hbm [resolvable:$true] %s318
          %s320 = sshll.u32 [#allocation5], 4
          %s321 = int_to_ptr.vmem [resolvable:$true] %s320
          %326 = dma.hbm_to_vmem [thread:$0]  %s319, 256, %s321, [#allocation6], 128, 128, 8
        $region16: #{tpu_custom_call.1} parent=11 // pred_fallthru
          _
        // Predicated region
        $region17: #{tpu_custom_call.1} parent=11 // pred_check
          %p327 = pneg %p80
        $region18: #{tpu_custom_call.1} parent=11 // pred_check_branch
          %329 = sbr.rel (%p327) target = $region20
        $region19: #{tpu_custom_call.1} parent=11 // pred_region
          %331 = vsyncadd [#allocation9], 0
          %s333 = sshll.u32 %s1, 4
          %s334 = int_to_ptr.hbm [resolvable:$true] %s333
          %s335 = sshll.u32 [#allocation8], 4
          %s336 = int_to_ptr.vmem [resolvable:$true] %s335
          %338 = dma.hbm_to_vmem [thread:$0]  %s334, 128, %s336, [#allocation9]
        $region20: #{tpu_custom_call.1} parent=11 // pred_fallthru
          _
        // Predicated region
        $region21: #{tpu_custom_call.1} parent=11 // pred_check
          %p339 = pneg %p101
        $region22: #{tpu_custom_call.1} parent=11 // pred_check_branch
          %341 = sbr.rel (%p339) target = $region24
        $region23: #{tpu_custom_call.1} parent=11 // pred_region
          %343 = vsyncadd [#allocation9], 0
          %s345 = sshll.u32 %s2, 4
          %s346 = int_to_ptr.hbm [resolvable:$true] %s345
          %s347 = sshll.u32 [#allocation10], 4
          %s348 = int_to_ptr.vmem [resolvable:$true] %s347
          %350 = dma.hbm_to_vmem [thread:$0]  %s346, 128, %s348, [#allocation9]
        $region24: #{tpu_custom_call.1} parent=11 // pred_fallthru
          _
        // Predicated region
        $region25: #{tpu_custom_call.1} parent=11 // pred_check
          %p351 = pneg %p122
        $region26: #{tpu_custom_call.1} parent=11 // pred_check_branch
          %353 = sbr.rel (%p351) target = $region28
        $region27: #{tpu_custom_call.1} parent=11 // pred_region
          %355 = vsyncadd [#allocation12], 0
          %s357 = sshll.u32 %s3, 4
          %s358 = int_to_ptr.hbm [resolvable:$true] %s357
          %s359 = sshll.u32 [#allocation11], 4
          %s360 = int_to_ptr.vmem [resolvable:$true] %s359
          %362 = dma.hbm_to_vmem [thread:$0]  %s358, 128, %s360, [#allocation12]
        $region28: #{tpu_custom_call.1} parent=11 // pred_fallthru
          _
        // Predicated region
        $region29: #{tpu_custom_call.1} parent=11 // pred_check
          %p363 = pneg %p143
        $region30: #{tpu_custom_call.1} parent=11 // pred_check_branch
          %365 = sbr.rel (%p363) target = $region32
        $region31: #{tpu_custom_call.1} parent=11 // pred_region
          _
        $region32: #{tpu_custom_call.1} parent=11 // pred_fallthru
          _
        // Predicated region
        $region33: #{tpu_custom_call.1} parent=11 // pred_check
          %p366 = pneg %p164
        $region34: #{tpu_custom_call.1} parent=11 // pred_check_branch
          %368 = sbr.rel (%p366) target = $region36
        $region35: #{tpu_custom_call.1} parent=11 // pred_region
          _
        $region36: #{tpu_custom_call.1} parent=11 // pred_fallthru
          _
        // Predicated region
        $region37: #{tpu_custom_call.1} parent=11 // pred_check
          %p369 = pneg %p185
        $region38: #{tpu_custom_call.1} parent=11 // pred_check_branch
          %371 = sbr.rel (%p369) target = $region40
        $region39: #{tpu_custom_call.1} parent=11 // pred_region
          _
        $region40: #{tpu_custom_call.1} parent=11 // pred_fallthru
          _
        // Predicated region
        $region41: #{tpu_custom_call.1} parent=11 // pred_check
          %p372 = pneg %p206
        $region42: #{tpu_custom_call.1} parent=11 // pred_check_branch
          %374 = sbr.rel (%p372) target = $region44
        $region43: #{tpu_custom_call.1} parent=11 // pred_region
          _
        $region44: #{tpu_custom_call.1} parent=11 // pred_fallthru
          _
        // Predicated region
        $region45: #{tpu_custom_call.1} parent=11 // pred_check
          %p375 = pneg %p227
        $region46: #{tpu_custom_call.1} parent=11 // pred_check_branch
          %377 = sbr.rel (%p375) target = $region48
        $region47: #{tpu_custom_call.1} parent=11 // pred_region
          %379 = vsyncadd [#allocation12], 0
          %s380 = sshll.u32 %s8, 4
          %s381 = int_to_ptr.hbm [resolvable:$true] %s380
          %s382 = sshll.u32 [#allocation13], 4
          %s383 = int_to_ptr.vmem [resolvable:$true] %s382
          %388 = dma.hbm_to_vmem [thread:$0]  %s381, 256, %s383, [#allocation12], 128, 128, 8
        $region48: #{tpu_custom_call.1} parent=11 // pred_fallthru
          _
        // Predicated region
        $region49: #{tpu_custom_call.1} parent=11 // pred_check
          %p389 = pneg %p248
        $region50: #{tpu_custom_call.1} parent=11 // pred_check_branch
          %391 = sbr.rel (%p389) target = $region52
        $region51: #{tpu_custom_call.1} parent=11 // pred_region
          _
        $region52: #{tpu_custom_call.1} parent=11 // pred_fallthru
          _
        // Predicated region
        $region53: #{tpu_custom_call.1} parent=11 // pred_check
          %p392 = pneg %p269
        $region54: #{tpu_custom_call.1} parent=11 // pred_check_branch
          %394 = sbr.rel (%p392) target = $region56
        $region55: #{tpu_custom_call.1} parent=11 // pred_region
          _
        $region56: #{tpu_custom_call.1} parent=11 // pred_fallthru
          _
      $region12: #{tpu_custom_call.1} parent=5 // pred_fallthru
        _
      %p395 = scmp.lt.s32.totalorder %s21, 2
      // Predicated region
      $region57: #{tpu_custom_call.1} parent=5 // pred_check
        %p396 = pneg %p395
      $region58: #{tpu_custom_call.1} parent=5 // pred_check_branch
        %398 = sbr.rel (%p396) target = $region60
      $region59: #{tpu_custom_call.1} parent=5 // pred_region
        _
      $region60: #{tpu_custom_call.1} parent=5 // pred_fallthru
        _
      %p399 = scmp.le.s32.totalorder 1, %s21
      %p400 = scmp.lt.s32.totalorder %s21, 3
      %p401 = pnand %p399, %p400
      %p402 = pneg %p401
      // Predicated region
      $region61: #{tpu_custom_call.1} parent=5 // pred_check
        _
      $region62: #{tpu_custom_call.1} parent=5 // pred_check_branch
        %404 = sbr.rel (%p401) target = $region64
      $region63: #{tpu_custom_call.1} parent=5 // pred_region
        %s405 = ssub.s32 %s21, 1
        // Predicated region
        $region65: #{tpu_custom_call.1} parent=63 // pred_check
          %p406 = pneg %p59
        $region66: #{tpu_custom_call.1} parent=63 // pred_check_branch
          %408 = sbr.rel (%p406) target = $region68
        $region67: #{tpu_custom_call.1} parent=63 // pred_region
          %410 = dma.done [#allocation6], 256
        $region68: #{tpu_custom_call.1} parent=63 // pred_fallthru
          _
        // Predicated region
        $region69: #{tpu_custom_call.1} parent=63 // pred_check
          %p411 = pneg %p80
        $region70: #{tpu_custom_call.1} parent=63 // pred_check_branch
          %413 = sbr.rel (%p411) target = $region72
        $region71: #{tpu_custom_call.1} parent=63 // pred_region
          %415 = dma.done [#allocation9], 128
        $region72: #{tpu_custom_call.1} parent=63 // pred_fallthru
          _
        // Predicated region
        $region73: #{tpu_custom_call.1} parent=63 // pred_check
          %p416 = pneg %p101
        $region74: #{tpu_custom_call.1} parent=63 // pred_check_branch
          %418 = sbr.rel (%p416) target = $region76
        $region75: #{tpu_custom_call.1} parent=63 // pred_region
          %420 = dma.done [#allocation9], 128
        $region76: #{tpu_custom_call.1} parent=63 // pred_fallthru
          _
        // Predicated region
        $region77: #{tpu_custom_call.1} parent=63 // pred_check
          %p421 = pneg %p122
        $region78: #{tpu_custom_call.1} parent=63 // pred_check_branch
          %423 = sbr.rel (%p421) target = $region80
        $region79: #{tpu_custom_call.1} parent=63 // pred_region
          %425 = dma.done [#allocation12], 128
        $region80: #{tpu_custom_call.1} parent=63 // pred_fallthru
          _
        // Predicated region
        $region81: #{tpu_custom_call.1} parent=63 // pred_check
          %p426 = pneg %p227
        $region82: #{tpu_custom_call.1} parent=63 // pred_check_branch
          %428 = sbr.rel (%p426) target = $region84
        $region83: #{tpu_custom_call.1} parent=63 // pred_region
          %430 = dma.done [#allocation12], 256
        $region84: #{tpu_custom_call.1} parent=63 // pred_fallthru
          _
        %p431 = pneg %p59
        %p432 = pneg %p56
        %p433 = pneg %p80
        %p434 = pneg %p77
        %p435 = pneg %p101
        %p436 = pneg %p98
        %p437 = pneg %p122
        %p438 = pneg %p119
        %p439 = pneg %p143
        %p440 = pneg %p140
        %p441 = pneg %p164
        %p442 = pneg %p161
        %p443 = pneg %p185
        %p444 = pneg %p182
        %p445 = pneg %p206
        %p446 = pneg %p203
        %p447 = pneg %p227
        %p448 = pneg %p224
        %p449 = pneg %p248
        %p450 = pneg %p245
        %p451 = pneg %p269
        %p452 = pneg %p266
        %p453 = pneg %p295
        %p454 = pneg %p292
        %s455 = smul.u32 2, %s30
        %s456 = smul.u32 2, %s30
        %p457 = scmp.eq.s32.totalorder %s31, 0
        // Predicated region
        $region85: #{tpu_custom_call.1} parent=63 // pred_check
          %p458 = pneg %p457
        $region86: #{tpu_custom_call.1} parent=63 // pred_check_branch
          %460 = sbr.rel (%p458) target = $region88
        $region87: #{tpu_custom_call.1} parent=63 // pred_region
          %v461 = vld [vmem:[#allocation5] sm:$0xff]
          %v462 = vld [vmem:[#allocation5 + $0x8] sm:$0xff]
          %vm463 = vcmask 261120
          %464 = vst.msk [vmem:[#allocation2] sm:$0xff] %vm463, %v461
          %465 = vst.msk [vmem:[#allocation2 + $0x8] sm:$0xff] %vm463, %v462
        $region88: #{tpu_custom_call.1} parent=63 // pred_fallthru
          _
        %v466 = vld [vmem:[#allocation2] sm:$0xff]
        %v467 = vld [vmem:[#allocation2 + $0x8] sm:$0xff]
        %v468 = vld [vmem:[#allocation13] sm:$0xff]
        %v469 = vld [vmem:[#allocation13 + $0x8] sm:$0x1]
        %v470 = vld [vmem:[#allocation8] sm:$0xff]
        %v471 = vld [vmem:[%s4] sm:$0xff]
        %v472 = vld [vmem:[%s4 + $0x8] sm:$0xff]
        %v473 = vld [vmem:[%s4 + $0x10] sm:$0xff]
        %v474 = vld [vmem:[%s4 + $0x18] sm:$0xff]
        %v475 = vld [vmem:[%s9] sm:$0x1]
        %v477 = vperm.slane %v475, 0
        %vm479 = vcmask 261120
        %v481 = vsel %vm479, %v466, 0
        %v484 = vsel %vm479, %v467, 0
        %486 = vmatpush.msra.mxu0 0.0
        %487 = vmatpush.msra.mxu0 0.0
        %488 = vmatpush.msra.mxu0 0.0
        %489 = vmatpush.msra.mxu0 0.0
        %490 = vmatpush.msra.mxu0 0.0
        %491 = vmatpush.msra.mxu0 0.0
        %492 = vmatpush.msra.mxu0 0.0
        %493 = vmatpush.msra.mxu0 0.0
        %494 = vmatpush.msra.mxu0 0.0
        %495 = vmatpush.msra.mxu0 0.0
        %496 = vmatpush.msra.mxu0 0.0
        %497 = vmatpush.msra.mxu0 0.0
        %498 = vmatpush.msra.mxu0 %v474
        %499 = vmatpush.msra.mxu0 %v473
        %500 = vmatpush.msra.mxu0 %v472
        %501 = vmatpush.msra.mxu0 %v471
        %502 = vmatmul.f32.gmra.mxu0 %v481
        %v503 = vpop.f32.mrf.mxu0
        %v504 = vadd.f32 %v477, %v503
        %505 = vmatmul.f32.gmra.mxu0 %v484
        %v506 = vpop.f32.mrf.mxu0
        %v507 = vadd.f32 %v477, %v506
        %508 = vdwg.mxu0
        %510 = vrot.lane.b32.xlu0 %v504, 96
        %v511 = vpop.permute.xlu0 %510
        %vm512 = vcmask 130048
        %v513 = vsel %vm512, %v504, 0
        %v515 = vsel %vm512, %v511, 0
        %517 = vmatpush.xpose.msra.mxu0 0.0
        %518 = vmatpush.xpose.msra.mxu0 0.0
        %519 = vmatpush.xpose.msra.mxu0 0.0
        %520 = vmatpush.xpose.msra.mxu0 0.0
        %521 = vmatpush.xpose.msra.mxu0 0.0
        %522 = vmatpush.xpose.msra.mxu0 0.0
        %523 = vmatpush.xpose.msra.mxu0 0.0
        %524 = vmatpush.xpose.msra.mxu0 0.0
        %525 = vmatpush.xpose.msra.mxu0 0.0
        %526 = vmatpush.xpose.msra.mxu0 0.0
        %527 = vmatpush.xpose.msra.mxu0 0.0
        %528 = vmatpush.xpose.msra.mxu0 0.0
        %529 = vmatpush.xpose.msra.mxu0 0.0
        %530 = vmatpush.xpose.msra.mxu0 0.0
        %531 = vmatpush.xpose.msra.mxu0 0.0
        %532 = vmatpush.xpose.msra.mxu0 %v515
        %533 = vmatmul.f32.gmra.mxu0 %v513
        %v534 = vpop.f32.mrf.mxu0
        %v535 = vadd.f32 %v470, %v534
        %536 = vdwg.mxu0
        %vm537 = vcmask 64512
        %v538 = vsel %vm537, %v535, -inf
        %539 = vmax.xlane.f32.xlu0 %v538
        %v540 = vpop.xlane.xlu0 %539
        %v541 = vsub.f32 %v535, %v540
        %v542 = vmul.f32 %v541, 1.442695
        %v543 = vpow.pop %v542
        %v544 = vsel %vm537, %v543, 0.0
        %545 = vadd.xlane.f32.xlu0 %v544
        %v546 = vpop.xlane.xlu0 %545
        %v547 = vrcp.pop %v546
        %v548 = vmul.f32 %v543, %v547
        %549 = vrot.lane.b32.xlu0 %v504, 64
        %v550 = vpop.permute.xlu0 %549
        %v553 = vsel %vm537, %v548, 0
        %555 = vmatpush.msra.mxu0 0.0
        %556 = vmatpush.msra.mxu0 0.0
        %557 = vmatpush.msra.mxu0 0.0
        %558 = vmatpush.msra.mxu0 0.0
        %559 = vmatpush.msra.mxu0 0.0
        %560 = vmatpush.msra.mxu0 0.0
        %561 = vmatpush.msra.mxu0 0.0
        %562 = vmatpush.msra.mxu0 0.0
        %563 = vmatpush.msra.mxu0 0.0
        %564 = vmatpush.msra.mxu0 0.0
        %565 = vmatpush.msra.mxu0 0.0
        %566 = vmatpush.msra.mxu0 0.0
        %567 = vmatpush.msra.mxu0 0.0
        %568 = vmatpush.msra.mxu0 0.0
        %569 = vmatpush.msra.mxu0 0.0
        %570 = vmatpush.msra.mxu0 %v550
        %571 = vmatmul.f32.gmra.mxu0 %v553
        %v572 = vpop.f32.mrf.mxu0
        %v573 = vadd.f32 0.0, %v572
        %574 = vdwg.mxu0
        %575 = vst.msk [vmem:[#allocation3] sm:$0xff] %vm512, %v573
        %576 = vrot.lane.b32.xlu0 %v504, 112
        %v577 = vpop.permute.xlu0 %576
        %578 = vrot.lane.b32.xlu0 %v504, 80
        %v579 = vpop.permute.xlu0 %578
        %v580 = vsel %vm512, %v577, 0
        %v582 = vsel %vm512, %v579, 0
        %584 = vmatpush.xpose.msra.mxu0 0.0
        %585 = vmatpush.xpose.msra.mxu0 0.0
        %586 = vmatpush.xpose.msra.mxu0 0.0
        %587 = vmatpush.xpose.msra.mxu0 0.0
        %588 = vmatpush.xpose.msra.mxu0 0.0
        %589 = vmatpush.xpose.msra.mxu0 0.0
        %590 = vmatpush.xpose.msra.mxu0 0.0
        %591 = vmatpush.xpose.msra.mxu0 0.0
        %592 = vmatpush.xpose.msra.mxu0 0.0
        %593 = vmatpush.xpose.msra.mxu0 0.0
        %594 = vmatpush.xpose.msra.mxu0 0.0
        %595 = vmatpush.xpose.msra.mxu0 0.0
        %596 = vmatpush.xpose.msra.mxu0 0.0
        %597 = vmatpush.xpose.msra.mxu0 0.0
        %598 = vmatpush.xpose.msra.mxu0 0.0
        %599 = vmatpush.xpose.msra.mxu0 %v582
        %600 = vmatmul.f32.gmra.mxu0 %v580
        %v601 = vpop.f32.mrf.mxu0
        %v602 = vadd.f32 %v470, %v601
        %603 = vdwg.mxu0
        %v604 = vsel %vm537, %v602, -inf
        %605 = vmax.xlane.f32.xlu0 %v604
        %v606 = vpop.xlane.xlu0 %605
        %v607 = vsub.f32 %v602, %v606
        %v608 = vmul.f32 %v607, 1.442695
        %v609 = vpow.pop %v608
        %v610 = vsel %vm537, %v609, 0.0
        %611 = vadd.xlane.f32.xlu0 %v610
        %v612 = vpop.xlane.xlu0 %611
        %v613 = vrcp.pop %v612
        %v614 = vmul.f32 %v609, %v613
        %615 = vrot.lane.b32.xlu0 %v504, 48
        %v616 = vpop.permute.xlu0 %615
        %v619 = vsel %vm537, %v614, 0
        %621 = vmatpush.msra.mxu0 0.0
        %622 = vmatpush.msra.mxu0 0.0
        %623 = vmatpush.msra.mxu0 0.0
        %624 = vmatpush.msra.mxu0 0.0
        %625 = vmatpush.msra.mxu0 0.0
        %626 = vmatpush.msra.mxu0 0.0
        %627 = vmatpush.msra.mxu0 0.0
        %628 = vmatpush.msra.mxu0 0.0
        %629 = vmatpush.msra.mxu0 0.0
        %630 = vmatpush.msra.mxu0 0.0
        %631 = vmatpush.msra.mxu0 0.0
        %632 = vmatpush.msra.mxu0 0.0
        %633 = vmatpush.msra.mxu0 0.0
        %634 = vmatpush.msra.mxu0 0.0
        %635 = vmatpush.msra.mxu0 0.0
        %636 = vmatpush.msra.mxu0 %v616
        %637 = vmatmul.f32.gmra.mxu0 %v619
        %v638 = vpop.f32.mrf.mxu0
        %v639 = vadd.f32 0.0, %v638
        %640 = vdwg.mxu0
        %642 = vrot.lane.b32.xlu0 %v639, 16
        %v643 = vpop.permute.xlu0 %642
        %vm645 = vcmask 261248
        %646 = vst.msk [vmem:[#allocation3] sm:$0xff] %vm645, %v643
        %v647 = vld [vmem:[#allocation10] sm:$0xff]
        %v648 = vld [vmem:[#allocation11] sm:$0xff]
        %v650 = vsel %vm537, %v648, 0
        %652 = vmatpush.msra.mxu0 0.0
        %653 = vmatpush.msra.mxu0 0.0
        %654 = vmatpush.msra.mxu0 0.0
        %655 = vmatpush.msra.mxu0 0.0
        %656 = vmatpush.msra.mxu0 0.0
        %657 = vmatpush.msra.mxu0 0.0
        %658 = vmatpush.msra.mxu0 0.0
        %659 = vmatpush.msra.mxu0 0.0
        %660 = vmatpush.msra.mxu0 0.0
        %661 = vmatpush.msra.mxu0 0.0
        %662 = vmatpush.msra.mxu0 0.0
        %663 = vmatpush.msra.mxu0 0.0
        %664 = vmatpush.msra.mxu0 0.0
        %665 = vmatpush.msra.mxu0 0.0
        %666 = vmatpush.msra.mxu0 0.0
        %667 = vmatpush.msra.mxu0 %v466
        %668 = vmatmul.f32.gmra.mxu0 %v650
        %v669 = vpop.f32.mrf.mxu0
        %v670 = vadd.f32 0.0, %v669
        %671 = vdwg.mxu0
        %v673 = vsel %vm537, %v647, 0
        %675 = vmatpush.msra.mxu0 0.0
        %676 = vmatpush.msra.mxu0 0.0
        %677 = vmatpush.msra.mxu0 0.0
        %678 = vmatpush.msra.mxu0 0.0
        %679 = vmatpush.msra.mxu0 0.0
        %680 = vmatpush.msra.mxu0 0.0
        %681 = vmatpush.msra.mxu0 0.0
        %682 = vmatpush.msra.mxu0 0.0
        %683 = vmatpush.msra.mxu0 0.0
        %684 = vmatpush.msra.mxu0 0.0
        %685 = vmatpush.msra.mxu0 0.0
        %686 = vmatpush.msra.mxu0 0.0
        %687 = vmatpush.msra.mxu0 0.0
        %688 = vmatpush.msra.mxu0 0.0
        %689 = vmatpush.msra.mxu0 0.0
        %690 = vmatpush.msra.mxu0 %v670
        %691 = vmatmul.f32.gmra.mxu0 %v673
        %v692 = vpop.f32.mrf.mxu0
        %v693 = vadd.f32 0.0, %v692
        %694 = vdwg.mxu0
        %695 = vst.msk [vmem:[#allocation4] sm:$0xff] %vm479, %v693
        %697 = vrot.lane.b32.xlu0 %v507, 96
        %v698 = vpop.permute.xlu0 %697
        %v699 = vsel %vm512, %v507, 0
        %v701 = vsel %vm512, %v698, 0
        %703 = vmatpush.xpose.msra.mxu0 0.0
        %704 = vmatpush.xpose.msra.mxu0 0.0
        %705 = vmatpush.xpose.msra.mxu0 0.0
        %706 = vmatpush.xpose.msra.mxu0 0.0
        %707 = vmatpush.xpose.msra.mxu0 0.0
        %708 = vmatpush.xpose.msra.mxu0 0.0
        %709 = vmatpush.xpose.msra.mxu0 0.0
        %710 = vmatpush.xpose.msra.mxu0 0.0
        %711 = vmatpush.xpose.msra.mxu0 0.0
        %712 = vmatpush.xpose.msra.mxu0 0.0
        %713 = vmatpush.xpose.msra.mxu0 0.0
        %714 = vmatpush.xpose.msra.mxu0 0.0
        %715 = vmatpush.xpose.msra.mxu0 0.0
        %716 = vmatpush.xpose.msra.mxu0 0.0
        %717 = vmatpush.xpose.msra.mxu0 0.0
        %718 = vmatpush.xpose.msra.mxu0 %v701
        %719 = vmatmul.f32.gmra.mxu0 %v699
        %v720 = vpop.f32.mrf.mxu0
        %v721 = vadd.f32 %v470, %v720
        %722 = vdwg.mxu0
        %v723 = vsel %vm537, %v721, -inf
        %724 = vmax.xlane.f32.xlu0 %v723
        %v725 = vpop.xlane.xlu0 %724
        %v726 = vsub.f32 %v721, %v725
        %v727 = vmul.f32 %v726, 1.442695
        %v728 = vpow.pop %v727
        %v729 = vsel %vm537, %v728, 0.0
        %730 = vadd.xlane.f32.xlu0 %v729
        %v731 = vpop.xlane.xlu0 %730
        %v732 = vrcp.pop %v731
        %v733 = vmul.f32 %v728, %v732
        %734 = vrot.lane.b32.xlu0 %v507, 64
        %v735 = vpop.permute.xlu0 %734
        %v738 = vsel %vm537, %v733, 0
        %740 = vmatpush.msra.mxu0 0.0
        %741 = vmatpush.msra.mxu0 0.0
        %742 = vmatpush.msra.mxu0 0.0
        %743 = vmatpush.msra.mxu0 0.0
        %744 = vmatpush.msra.mxu0 0.0
        %745 = vmatpush.msra.mxu0 0.0
        %746 = vmatpush.msra.mxu0 0.0
        %747 = vmatpush.msra.mxu0 0.0
        %748 = vmatpush.msra.mxu0 0.0
        %749 = vmatpush.msra.mxu0 0.0
        %750 = vmatpush.msra.mxu0 0.0
        %751 = vmatpush.msra.mxu0 0.0
        %752 = vmatpush.msra.mxu0 0.0
        %753 = vmatpush.msra.mxu0 0.0
        %754 = vmatpush.msra.mxu0 0.0
        %755 = vmatpush.msra.mxu0 %v735
        %756 = vmatmul.f32.gmra.mxu0 %v738
        %v757 = vpop.f32.mrf.mxu0
        %v758 = vadd.f32 0.0, %v757
        %759 = vdwg.mxu0
        %760 = vst.msk [vmem:[#allocation3 + $0x8] sm:$0xff] %vm512, %v758
        %761 = vrot.lane.b32.xlu0 %v507, 112
        %v762 = vpop.permute.xlu0 %761
        %763 = vrot.lane.b32.xlu0 %v507, 80
        %v764 = vpop.permute.xlu0 %763
        %v765 = vsel %vm512, %v762, 0
        %v767 = vsel %vm512, %v764, 0
        %769 = vmatpush.xpose.msra.mxu0 0.0
        %770 = vmatpush.xpose.msra.mxu0 0.0
        %771 = vmatpush.xpose.msra.mxu0 0.0
        %772 = vmatpush.xpose.msra.mxu0 0.0
        %773 = vmatpush.xpose.msra.mxu0 0.0
        %774 = vmatpush.xpose.msra.mxu0 0.0
        %775 = vmatpush.xpose.msra.mxu0 0.0
        %776 = vmatpush.xpose.msra.mxu0 0.0
        %777 = vmatpush.xpose.msra.mxu0 0.0
        %778 = vmatpush.xpose.msra.mxu0 0.0
        %779 = vmatpush.xpose.msra.mxu0 0.0
        %780 = vmatpush.xpose.msra.mxu0 0.0
        %781 = vmatpush.xpose.msra.mxu0 0.0
        %782 = vmatpush.xpose.msra.mxu0 0.0
        %783 = vmatpush.xpose.msra.mxu0 0.0
        %784 = vmatpush.xpose.msra.mxu0 %v767
        %785 = vmatmul.f32.gmra.mxu0 %v765
        %v786 = vpop.f32.mrf.mxu0
        %v787 = vadd.f32 %v470, %v786
        %788 = vdwg.mxu0
        %v789 = vsel %vm537, %v787, -inf
        %790 = vmax.xlane.f32.xlu0 %v789
        %v791 = vpop.xlane.xlu0 %790
        %v792 = vsub.f32 %v787, %v791
        %v793 = vmul.f32 %v792, 1.442695
        %v794 = vpow.pop %v793
        %v795 = vsel %vm537, %v794, 0.0
        %796 = vadd.xlane.f32.xlu0 %v795
        %v797 = vpop.xlane.xlu0 %796
        %v798 = vrcp.pop %v797
        %v799 = vmul.f32 %v794, %v798
        %800 = vrot.lane.b32.xlu0 %v507, 48
        %v801 = vpop.permute.xlu0 %800
        %v804 = vsel %vm537, %v799, 0
        %806 = vmatpush.msra.mxu0 0.0
        %807 = vmatpush.msra.mxu0 0.0
        %808 = vmatpush.msra.mxu0 0.0
        %809 = vmatpush.msra.mxu0 0.0
        %810 = vmatpush.msra.mxu0 0.0
        %811 = vmatpush.msra.mxu0 0.0
        %812 = vmatpush.msra.mxu0 0.0
        %813 = vmatpush.msra.mxu0 0.0
        %814 = vmatpush.msra.mxu0 0.0
        %815 = vmatpush.msra.mxu0 0.0
        %816 = vmatpush.msra.mxu0 0.0
        %817 = vmatpush.msra.mxu0 0.0
        %818 = vmatpush.msra.mxu0 0.0
        %819 = vmatpush.msra.mxu0 0.0
        %820 = vmatpush.msra.mxu0 0.0
        %821 = vmatpush.msra.mxu0 %v801
        %822 = vmatmul.f32.gmra.mxu0 %v804
        %v823 = vpop.f32.mrf.mxu0
        %v824 = vadd.f32 0.0, %v823
        %825 = vdwg.mxu0
        %827 = vrot.lane.b32.xlu0 %v824, 16
        %v828 = vpop.permute.xlu0 %827
        %830 = vst.msk [vmem:[#allocation3 + $0x8] sm:$0xff] %vm645, %v828
        %v831 = vld [vmem:[#allocation10] sm:$0xff]
        %v832 = vld [vmem:[#allocation11] sm:$0xff]
        %v834 = vsel %vm537, %v832, 0
        %836 = vmatpush.msra.mxu0 0.0
        %837 = vmatpush.msra.mxu0 0.0
        %838 = vmatpush.msra.mxu0 0.0
        %839 = vmatpush.msra.mxu0 0.0
        %840 = vmatpush.msra.mxu0 0.0
        %841 = vmatpush.msra.mxu0 0.0
        %842 = vmatpush.msra.mxu0 0.0
        %843 = vmatpush.msra.mxu0 0.0
        %844 = vmatpush.msra.mxu0 0.0
        %845 = vmatpush.msra.mxu0 0.0
        %846 = vmatpush.msra.mxu0 0.0
        %847 = vmatpush.msra.mxu0 0.0
        %848 = vmatpush.msra.mxu0 0.0
        %849 = vmatpush.msra.mxu0 0.0
        %850 = vmatpush.msra.mxu0 0.0
        %851 = vmatpush.msra.mxu0 %v467
        %852 = vmatmul.f32.gmra.mxu0 %v834
        %v853 = vpop.f32.mrf.mxu0
        %v854 = vadd.f32 0.0, %v853
        %855 = vdwg.mxu0
        %v857 = vsel %vm537, %v831, 0
        %859 = vmatpush.msra.mxu0 0.0
        %860 = vmatpush.msra.mxu0 0.0
        %861 = vmatpush.msra.mxu0 0.0
        %862 = vmatpush.msra.mxu0 0.0
        %863 = vmatpush.msra.mxu0 0.0
        %864 = vmatpush.msra.mxu0 0.0
        %865 = vmatpush.msra.mxu0 0.0
        %866 = vmatpush.msra.mxu0 0.0
        %867 = vmatpush.msra.mxu0 0.0
        %868 = vmatpush.msra.mxu0 0.0
        %869 = vmatpush.msra.mxu0 0.0
        %870 = vmatpush.msra.mxu0 0.0
        %871 = vmatpush.msra.mxu0 0.0
        %872 = vmatpush.msra.mxu0 0.0
        %873 = vmatpush.msra.mxu0 0.0
        %874 = vmatpush.msra.mxu0 %v854
        %875 = vmatmul.f32.gmra.mxu0 %v857
        %v876 = vpop.f32.mrf.mxu0
        %v877 = vadd.f32 0.0, %v876
        %878 = vdwg.mxu0
        %879 = vst.msk [vmem:[#allocation4 + $0x8] sm:$0xff] %vm479, %v877
        %v880 = vld [vmem:[#allocation3] sm:$0xff]
        %v881 = vld [vmem:[#allocation3 + $0x8] sm:$0xff]
        %v882 = vld [vmem:[%s5] sm:$0xff]
        %v883 = vld [vmem:[%s5 + $0x8] sm:$0xff]
        %v884 = vld [vmem:[%s5 + $0x10] sm:$0xff]
        %v885 = vld [vmem:[%s5 + $0x18] sm:$0xff]
        %v886 = vperm.slane %v468, 0
        %v888 = vsel %vm479, %v880, 0
        %v891 = vsel %vm479, %v881, 0
        %893 = vmatpush.msra.mxu0 0.0
        %894 = vmatpush.msra.mxu0 0.0
        %895 = vmatpush.msra.mxu0 0.0
        %896 = vmatpush.msra.mxu0 0.0
        %897 = vmatpush.msra.mxu0 0.0
        %898 = vmatpush.msra.mxu0 0.0
        %899 = vmatpush.msra.mxu0 0.0
        %900 = vmatpush.msra.mxu0 0.0
        %901 = vmatpush.msra.mxu0 0.0
        %902 = vmatpush.msra.mxu0 0.0
        %903 = vmatpush.msra.mxu0 0.0
        %904 = vmatpush.msra.mxu0 0.0
        %905 = vmatpush.msra.mxu0 %v885
        %906 = vmatpush.msra.mxu0 %v884
        %907 = vmatpush.msra.mxu0 %v883
        %908 = vmatpush.msra.mxu0 %v882
        %909 = vmatmul.f32.gmra.mxu0 %v888
        %v910 = vpop.f32.mrf.mxu0
        %v911 = vadd.f32 %v886, %v910
        %912 = vmatmul.f32.gmra.mxu0 %v891
        %v913 = vpop.f32.mrf.mxu0
        %v914 = vadd.f32 %v886, %v913
        %915 = vdwg.mxu0
        %v916 = vadd.f32 %v911, %v466
        %v917 = vadd.f32 %v914, %v467
        %v918 = vsel %vm479, %v916, 0.0
        %919 = vadd.xlane.f32.xlu0 %v918
        %v920 = vpop.xlane.xlu0 %919
        %v921 = vsel %vm479, %v917, 0.0
        %922 = vadd.xlane.f32.xlu0 %v921
        %v923 = vpop.xlane.xlu0 %922
        %v924 = vrcp.pop 32.0
        %v925 = vmul.f32 32.0, %v924
        %v926 = vsub.f32 1.0, %v925
        %v927 = vmul.f32 %v924, %v926
        %v928 = vadd.f32 %v924, %v927
        %vm929 = vweird.f32 %v924
        %v930 = vsel %vm929, %v924, %v928
        %v931 = vmul.f32 %v920, %v930
        %v932 = vmul.f32 %v923, %v930
        %v933 = vsub.f32 %v916, %v931
        %v934 = vsub.f32 %v917, %v932
        %v935 = vmul.f32 %v933, %v933
        %v936 = vmul.f32 %v934, %v934
        %v937 = vsel %vm479, %v935, 0.0
        %938 = vadd.xlane.f32.xlu0 %v937
        %v939 = vpop.xlane.xlu0 %938
        %v940 = vsel %vm479, %v936, 0.0
        %941 = vadd.xlane.f32.xlu0 %v940
        %v942 = vpop.xlane.xlu0 %941
        %v943 = vmul.f32 %v939, %v930
        %v944 = vmul.f32 %v942, %v930
        %v945 = vadd.f32 %v943, 1e-12
        %v946 = vadd.f32 %v944, 1e-12
        %v947 = vrsqrt.pop %v945
        %v948 = vmul.f32 %v947, %v945
        %v949 = vmul.f32 %v948, %v947
        %v950 = vmul.f32 0.5, %v949
        %v951 = vsub.f32 1.5, %v950
        %v952 = vmul.f32 %v947, %v951
        %vm953 = vweird.f32 %v945
        %vm954 = vweird.f32 %v947
        %vm955 = vmor %vm953, %vm954
        %v956 = vsel %vm955, %v947, %v952
        %v957 = vrsqrt.pop %v946
        %v958 = vmul.f32 %v957, %v946
        %v959 = vmul.f32 %v958, %v957
        %v960 = vmul.f32 0.5, %v959
        %v961 = vsub.f32 1.5, %v960
        %v962 = vmul.f32 %v957, %v961
        %vm963 = vweird.f32 %v946
        %vm964 = vweird.f32 %v957
        %vm965 = vmor %vm963, %vm964
        %v966 = vsel %vm965, %v957, %v962
        %v967 = vmul.f32 %v933, %v956
        %v968 = vmul.f32 %v934, %v966
        %v969 = vperm.slane %v468, 2
        %v970 = vmul.f32 %v967, %v969
        %v971 = vmul.f32 %v968, %v969
        %v972 = vperm.slane %v468, 3
        %v973 = vadd.f32 %v970, %v972
        %v974 = vadd.f32 %v971, %v972
        %v975 = vld [vmem:[#allocation4] sm:$0xff]
        %v976 = vld [vmem:[#allocation4 + $0x8] sm:$0xff]
        %v977 = vsub.f32 %v466, %v975
        %v978 = vsub.f32 %v467, %v976
        %v979 = vperm.slane %v468, 1
        %v980 = vmul.f32 %v979, %v977
        %v981 = vmul.f32 %v979, %v978
        %v982 = vadd.f32 %v975, %v980
        %v983 = vadd.f32 %v976, %v981
        %v984 = vadd.f32 %v982, %v466
        %v985 = vadd.f32 %v983, %v467
        %v986 = vsel %vm479, %v984, 0.0
        %987 = vadd.xlane.f32.xlu0 %v986
        %v988 = vpop.xlane.xlu0 %987
        %v989 = vsel %vm479, %v985, 0.0
        %990 = vadd.xlane.f32.xlu0 %v989
        %v991 = vpop.xlane.xlu0 %990
        %v992 = vmul.f32 %v988, %v930
        %v993 = vmul.f32 %v991, %v930
        %v994 = vsub.f32 %v984, %v992
        %v995 = vsub.f32 %v985, %v993
        %v996 = vmul.f32 %v994, %v994
        %v997 = vmul.f32 %v995, %v995
        %v998 = vsel %vm479, %v996, 0.0
        %999 = vadd.xlane.f32.xlu0 %v998
        %v1000 = vpop.xlane.xlu0 %999
        %v1001 = vsel %vm479, %v997, 0.0
        %1002 = vadd.xlane.f32.xlu0 %v1001
        %v1003 = vpop.xlane.xlu0 %1002
        %v1004 = vmul.f32 %v1000, %v930
        %v1005 = vmul.f32 %v1003, %v930
        %v1006 = vadd.f32 %v1004, 1e-12
        %v1007 = vadd.f32 %v1005, 1e-12
        %v1008 = vrsqrt.pop %v1006
        %v1009 = vmul.f32 %v1008, %v1006
        %v1010 = vmul.f32 %v1009, %v1008
        %v1011 = vmul.f32 0.5, %v1010
        %v1012 = vsub.f32 1.5, %v1011
        %v1013 = vmul.f32 %v1008, %v1012
        %vm1014 = vweird.f32 %v1006
        %vm1015 = vweird.f32 %v1008
        %vm1016 = vmor %vm1014, %vm1015
        %v1017 = vsel %vm1016, %v1008, %v1013
        %v1018 = vrsqrt.pop %v1007
        %v1019 = vmul.f32 %v1018, %v1007
        %v1020 = vmul.f32 %v1019, %v1018
        %v1021 = vmul.f32 0.5, %v1020
        %v1022 = vsub.f32 1.5, %v1021
        %v1023 = vmul.f32 %v1018, %v1022
        %vm1024 = vweird.f32 %v1007
        %vm1025 = vweird.f32 %v1018
        %vm1026 = vmor %vm1024, %vm1025
        %v1027 = vsel %vm1026, %v1018, %v1023
        %v1028 = vmul.f32 %v994, %v1017
        %v1029 = vmul.f32 %v995, %v1027
        %v1030 = vperm.slane %v468, 4
        %v1031 = vmul.f32 %v1028, %v1030
        %v1032 = vmul.f32 %v1029, %v1030
        %v1033 = vperm.slane %v468, 5
        %v1034 = vadd.f32 %v1031, %v1033
        %v1035 = vadd.f32 %v1032, %v1033
        %v1036 = vmul.f32 %v1034, 0.7
        %v1037 = vmul.f32 %v1035, 0.7
        %v1038 = vmul.f32 %v973, 0.3
        %v1039 = vmul.f32 %v974, 0.3
        %v1040 = vadd.f32 %v1036, %v1038
        %v1041 = vadd.f32 %v1037, %v1039
        %v1042 = vld [vmem:[%s6] sm:$0xff]
        %v1043 = vld [vmem:[%s6 + $0x8] sm:$0xff]
        %v1044 = vld [vmem:[%s6 + $0x10] sm:$0xff]
        %v1045 = vld [vmem:[%s6 + $0x18] sm:$0xff]
        %v1046 = vld [vmem:[%s10] sm:$0x1]
        %v1048 = vperm.slane %v1046, 0
        %v1051 = vsel %vm479, %v1040, 0
        %v1054 = vsel %vm479, %v1041, 0
        %1056 = vmatpush.msra.mxu0 0.0
        %1057 = vmatpush.msra.mxu0 0.0
        %1058 = vmatpush.msra.mxu0 0.0
        %1059 = vmatpush.msra.mxu0 0.0
        %1060 = vmatpush.msra.mxu0 0.0
        %1061 = vmatpush.msra.mxu0 0.0
        %1062 = vmatpush.msra.mxu0 0.0
        %1063 = vmatpush.msra.mxu0 0.0
        %1064 = vmatpush.msra.mxu0 0.0
        %1065 = vmatpush.msra.mxu0 0.0
        %1066 = vmatpush.msra.mxu0 0.0
        %1067 = vmatpush.msra.mxu0 0.0
        %1068 = vmatpush.msra.mxu0 %v1045
        %1069 = vmatpush.msra.mxu0 %v1044
        %1070 = vmatpush.msra.mxu0 %v1043
        %1071 = vmatpush.msra.mxu0 %v1042
        %1072 = vmatmul.f32.gmra.mxu0 %v1051
        %v1073 = vpop.f32.mrf.mxu0
        %v1074 = vadd.f32 %v1048, %v1073
        %1075 = vmatmul.f32.gmra.mxu0 %v1054
        %v1076 = vpop.f32.mrf.mxu0
        %v1077 = vadd.f32 %v1048, %v1076
        %1078 = vdwg.mxu0
        %v1079 = vmul.f32 %v1074, 0.5
        %v1080 = vmul.f32 %v1077, 0.5
        %v1081 = vmul.f32 %v1074, 0.044715
        %v1082 = vmul.f32 %v1077, 0.044715
        %v1083 = vmul.f32 %v1081, %v1074
        %v1084 = vmul.f32 %v1082, %v1077
        %v1085 = vmul.f32 %v1083, %v1074
        %v1086 = vmul.f32 %v1084, %v1077
        %v1087 = vadd.f32 %v1074, %v1085
        %v1088 = vadd.f32 %v1077, %v1086
        %v1089 = vmul.f32 %v1087, 0.7978846
        %v1090 = vmul.f32 %v1088, 0.7978846
        %v1091 = vtanh.pop %v1089
        %v1092 = vtanh.pop %v1090
        %v1093 = vadd.f32 %v1091, 1.0
        %v1094 = vadd.f32 %v1092, 1.0
        %v1095 = vmul.f32 %v1079, %v1093
        %v1096 = vmul.f32 %v1080, %v1094
        %v1097 = vld [vmem:[%s7] sm:$0xff]
        %v1098 = vld [vmem:[%s7 + $0x8] sm:$0xff]
        %v1099 = vld [vmem:[%s7 + $0x10] sm:$0xff]
        %v1100 = vld [vmem:[%s7 + $0x18] sm:$0xff]
        %v1101 = vld [vmem:[%s7 + $0x20] sm:$0xff]
        %v1102 = vld [vmem:[%s7 + $0x28] sm:$0xff]
        %v1103 = vld [vmem:[%s7 + $0x30] sm:$0xff]
        %v1104 = vld [vmem:[%s7 + $0x38] sm:$0xff]
        %v1105 = vperm.slane %v468, 6
        %vm1106 = vcmask 523264
        %v1108 = vsel %vm1106, %v1095, 0
        %v1111 = vsel %vm1106, %v1096, 0
        %1113 = vmatpush.msra.mxu0 0.0
        %1114 = vmatpush.msra.mxu0 0.0
        %1115 = vmatpush.msra.mxu0 0.0
        %1116 = vmatpush.msra.mxu0 0.0
        %1117 = vmatpush.msra.mxu0 0.0
        %1118 = vmatpush.msra.mxu0 0.0
        %1119 = vmatpush.msra.mxu0 0.0
        %1120 = vmatpush.msra.mxu0 0.0
        %1121 = vmatpush.msra.mxu0 %v1104
        %1122 = vmatpush.msra.mxu0 %v1103
        %1123 = vmatpush.msra.mxu0 %v1102
        %1124 = vmatpush.msra.mxu0 %v1101
        %1125 = vmatpush.msra.mxu0 %v1100
        %1126 = vmatpush.msra.mxu0 %v1099
        %1127 = vmatpush.msra.mxu0 %v1098
        %1128 = vmatpush.msra.mxu0 %v1097
        %1129 = vmatmul.f32.gmra.mxu0 %v1108
        %v1130 = vpop.f32.mrf.mxu0
        %v1131 = vadd.f32 %v1105, %v1130
        %1132 = vmatmul.f32.gmra.mxu0 %v1111
        %v1133 = vpop.f32.mrf.mxu0
        %v1134 = vadd.f32 %v1105, %v1133
        %1135 = vdwg.mxu0
        %v1136 = vadd.f32 %v1131, %v1040
        %v1137 = vadd.f32 %v1134, %v1041
        %v1138 = vsel %vm479, %v1136, 0.0
        %1139 = vadd.xlane.f32.xlu0 %v1138
        %v1140 = vpop.xlane.xlu0 %1139
        %v1141 = vsel %vm479, %v1137, 0.0
        %1142 = vadd.xlane.f32.xlu0 %v1141
        %v1143 = vpop.xlane.xlu0 %1142
        %v1144 = vmul.f32 %v1140, %v930
        %v1145 = vmul.f32 %v1143, %v930
        %v1146 = vsub.f32 %v1136, %v1144
        %v1147 = vsub.f32 %v1137, %v1145
        %v1148 = vmul.f32 %v1146, %v1146
        %v1149 = vmul.f32 %v1147, %v1147
        %v1150 = vsel %vm479, %v1148, 0.0
        %1151 = vadd.xlane.f32.xlu0 %v1150
        %v1152 = vpop.xlane.xlu0 %1151
        %v1153 = vsel %vm479, %v1149, 0.0
        %1154 = vadd.xlane.f32.xlu0 %v1153
        %v1155 = vpop.xlane.xlu0 %1154
        %v1156 = vmul.f32 %v1152, %v930
        %v1157 = vmul.f32 %v1155, %v930
        %v1158 = vadd.f32 %v1156, 1e-12
        %v1159 = vadd.f32 %v1157, 1e-12
        %v1160 = vrsqrt.pop %v1158
        %v1161 = vmul.f32 %v1160, %v1158
        %v1162 = vmul.f32 %v1161, %v1160
        %v1163 = vmul.f32 0.5, %v1162
        %v1164 = vsub.f32 1.5, %v1163
        %v1165 = vmul.f32 %v1160, %v1164
        %vm1166 = vweird.f32 %v1158
        %vm1167 = vweird.f32 %v1160
        %vm1168 = vmor %vm1166, %vm1167
        %v1169 = vsel %vm1168, %v1160, %v1165
        %v1170 = vrsqrt.pop %v1159
        %v1171 = vmul.f32 %v1170, %v1159
        %v1172 = vmul.f32 %v1171, %v1170
        %v1173 = vmul.f32 0.5, %v1172
        %v1174 = vsub.f32 1.5, %v1173
        %v1175 = vmul.f32 %v1170, %v1174
        %vm1176 = vweird.f32 %v1159
        %vm1177 = vweird.f32 %v1170
        %vm1178 = vmor %vm1176, %vm1177
        %v1179 = vsel %vm1178, %v1170, %v1175
        %v1180 = vmul.f32 %v1146, %v1169
        %v1181 = vmul.f32 %v1147, %v1179
        %v1182 = vperm.slane %v468, 7
        %v1183 = vmul.f32 %v1180, %v1182
        %v1184 = vmul.f32 %v1181, %v1182
        %v1185 = vperm.slane %v469, 0
        %v1186 = vadd.f32 %v1183, %v1185
        %v1187 = vadd.f32 %v1184, %v1185
        %1188 = vst.msk [vmem:[#allocation2] sm:$0xff] %vm479, %v1186
        %1189 = vst.msk [vmem:[#allocation2 + $0x8] sm:$0xff] %vm479, %v1187
        %p1190 = scmp.eq.s32.totalorder %s31, 1
        // Predicated region
        $region89: #{tpu_custom_call.1} parent=63 // pred_check
          %p1191 = pneg %p1190
        $region90: #{tpu_custom_call.1} parent=63 // pred_check_branch
          %1193 = sbr.rel (%p1191) target = $region92
        $region91: #{tpu_custom_call.1} parent=63 // pred_region
          %1194 = vst.msk [vmem:[#allocation14] sm:$0xff] %vm479, %v1186
          %1195 = vst.msk [vmem:[#allocation14 + $0x8] sm:$0xff] %vm479, %v1187
        $region92: #{tpu_custom_call.1} parent=63 // pred_fallthru
          _
        // Predicated region
        $region93: #{tpu_custom_call.1} parent=63 // pred_check
          %p1196 = pneg %p292
        $region94: #{tpu_custom_call.1} parent=63 // pred_check_branch
          %1198 = sbr.rel (%p1196) target = $region96
        $region95: #{tpu_custom_call.1} parent=63 // pred_region
          %s1199 = smul.u32 2, %s30
          %1201 = vsyncadd [#allocation7], 0
          %s1202 = smul.addr %s1199, 8
          %s1203 = scalar_lea.hbm %s11, %s1202
          %s1204 = sshll.u32 [#allocation14], 4
          %s1205 = int_to_ptr.vmem [resolvable:$true] %s1204
          %s1206 = sshll.u32 %s1203, 4
          %s1207 = int_to_ptr.hbm [resolvable:$true] %s1206
          %1212 = dma.vmem_to_hbm [thread:$0]  %s1205, 256, %s1207, [#allocation7], 128, 128, 8
        $region96: #{tpu_custom_call.1} parent=63 // pred_fallthru
          _
        // Predicated region
        $region97: #{tpu_custom_call.1} parent=63 // pred_check
          %p1213 = pneg %p292
        $region98: #{tpu_custom_call.1} parent=63 // pred_check_branch
          %1215 = sbr.rel (%p1213) target = $region100
        $region99: #{tpu_custom_call.1} parent=63 // pred_region
          %1217 = dma.done [#allocation7], 256
        $region100: #{tpu_custom_call.1} parent=63 // pred_fallthru
          _
      $region64: #{tpu_custom_call.1} parent=5 // pred_fallthru
        _
      %p1218 = scmp.le.s32.totalorder 2, %s21
      // Predicated region
      $region101: #{tpu_custom_call.1} parent=5 // pred_check
        %p1219 = pneg %p1218
      $region102: #{tpu_custom_call.1} parent=5 // pred_check_branch
        %1221 = sbr.rel (%p1219) target = $region104
      $region103: #{tpu_custom_call.1} parent=5 // pred_region
        %s1222 = ssub.s32 %s21, 2
      $region104: #{tpu_custom_call.1} parent=5 // pred_fallthru
        _
    $region6: #{tpu_custom_call.1} parent=1 // loop_footer
      %s25 = sadd.s32 1, %s21
    $region7: #{tpu_custom_call.1} parent=1 // loop_footer_branch
      %20 = sbr.rel target = $region3
    $region8: #{tpu_custom_call.1} parent=1 // loop_exit
      _
    %1223 = vsyncpa [#allocation6], 1
    %s1224 = scalar_lea.sflag [#allocation6], 1
    %1225 = vsyncpa %s1224, 1
    %1226 = vsyncpa [#allocation9], 1
    %1227 = vsyncpa [#allocation12], 1
    %1228 = vsyncpa [#allocation7], 1
    %s1229 = scalar_lea.sflag [#allocation7], 1
    %1230 = vsyncpa %s1229, 1

</llo_original>
